<compile_context>
chip_gen: v5e
topology: v5e:2x2
jax: 0.10.0
libtpu: 0.0.40
codegen_flags: <defaults>
</compile_context>

<pallas_src>
import math
import numpy as np

import jax
import jax.numpy as jnp
from jax import lax
from jax.experimental import pallas as pl
from jax.experimental.pallas import tpu as pltpu

# ----------------------------- configuration --------------------------------
BATCH = 2
N_STEPS = 16          # L
N_FEATURES = 4        # F
N_LAYERS = 2
D_MODEL = 32
N_HEADS = 4
D_FFN = 64
FACTOR = 1
MOVING_AVG_WIN = 5    # odd, as in the original Autoformer
LN_EPS = 1e-5
OUT_PAD = 128         # lane-dense output width (final store), sliced in wrapper
TOP_K = max(1, int(FACTOR * math.log(N_STEPS)))   # = 2 for L=16


# ------------------------- fused per-batch kernel ----------------------------
def _autoformer_kernel(
    xm_ref,       # [L, 2F]           f32  concat(X, mask)
    xpad_ref,     # [L, OUT_PAD]      f32  X, lane-padded
    mpad_ref,     # [L, OUT_PAD]      f32  mask, lane-padded
    emb_w_ref,    # [2F, D]           bf16
    emb_b_ref,    # [1, D]            f32
    qkvo_w_ref,   # [N_LAYERS, D, 4D] bf16  (Wq | Wk | Wv | Wo)
    qkvo_b_ref,   # [N_LAYERS, 1, 4D] f32
    ffn_w1_ref,   # [N_LAYERS, D, D_FFN] bf16
    ffn_w2_ref,   # [N_LAYERS, D_FFN, D] bf16
    norm_gb_ref,  # [2, D]            f32  (gamma ; beta)
    ma_ref,       # [L, L]            bf16 moving-average matrix
    out_w_ref,    # [D, OUT_PAD]      bf16
    out_b_ref,    # [1, OUT_PAD]      f32
    o_ref,        # [L, OUT_PAD]      f32
    g2_ref,       # VMEM scratch [2L, L] f32 (doubled Gram matrix)
):
    L, D = N_STEPS, D_MODEL
    f32, bf16 = jnp.float32, jnp.bfloat16

    def mm(a, b):
        # bf16 MXU operands, f32 accumulation.
        return jnp.dot(a.astype(bf16), b.astype(bf16), preferred_element_type=f32)

    t_f = lax.broadcasted_iota(jnp.int32, (L, L), 0).astype(f32)   # row index t
    s_f = lax.broadcasted_iota(jnp.int32, (L, L), 1).astype(f32)   # col index s
    iota_col = lax.broadcasted_iota(jnp.int32, (L, 1), 0).astype(f32)

    ma = ma_ref[...]                                               # [L, L] bf16

    # ---- SaitsEmbedding: Linear(concat(X, mask)) ----
    x = mm(xm_ref[...], emb_w_ref[...]) + emb_b_ref[...]           # [L, D] f32

    for l in range(N_LAYERS):
        # ---- AutoCorrelation attention: fused QKV projection ----
        w_qkv = qkvo_w_ref[l, :, 0:3 * D]                          # [D, 3D] bf16
        w_o = qkvo_w_ref[l, :, 3 * D:4 * D]                        # [D, D]  bf16
        b_qkv = qkvo_b_ref[l, :, 0:3 * D]                          # [1, 3D] f32
        b_o = qkvo_b_ref[l, :, 3 * D:4 * D]                        # [1, D]  f32
        qkv = mm(x, w_qkv) + b_qkv                                 # [L, 3D] f32
        q = qkv[:, 0:D]
        k = qkv[:, D:2 * D]
        v = qkv[:, 2 * D:3 * D]

        # Gram matrix G[s, t] = <q_s, k_t>  (one [L,D]x[L,D]^T matmul)
        g = lax.dot_general(q.astype(bf16), k.astype(bf16),
                            (((1,), (1,)), ((), ())),
                            preferred_element_type=f32)            # [L, L] f32

        # circular-diagonal sums of G (== irfft(rfft(q)*conj(rfft(k))) summed
        # over channels):  mv[tau] = (1/D) * sum_t G[(t+tau)%L, t]
        g2_ref[0:L, :] = g
        g2_ref[L:2 * L, :] = g
        mv = g2_ref[0:L, 0:1]
        for t in range(1, L):
            mv = mv + g2_ref[t:t + L, t:t + 1]
        mv = mv * (1.0 / D)                                        # [L, 1] f32

        # inference-mode time-delay aggregation: top-k delays + softmax weights
        # + circular-gather mixing matrix, built in-kernel (f32 throughout).
        m0 = jnp.max(mv)
        e = jnp.exp(mv - m0)                 # softmax numerators over all taus
        remaining = mv
        dmt = jnp.zeros((L, L), f32)
        denom = jnp.zeros((1, 1), f32)
        for _ in range(TOP_K):
            mi = jnp.max(remaining)
            idx = jnp.min(jnp.where(remaining == mi, iota_col, float(L)))
            ei = jnp.sum(jnp.where(iota_col == idx, e, 0.0))
            td = t_f + idx                   # delay < L  ->  (t+delay) % L
            td = jnp.where(td >= float(L), td - float(L), td)
            dmt = dmt + ei * (td == s_f).astype(f32)
            denom = denom + ei
            remaining = jnp.where(iota_col == idx, -1e30, remaining)
        dmt = dmt * pl.reciprocal(denom, approx=True)              # EUP divide

        attn = mm(dmt, v)                                          # [L, D]
        new_x = mm(attn, w_o) + b_o

        # decomp1(x + attn):  residual = s - moving_average(s)
        s1 = x + new_x
        x1 = s1 - mm(ma, s1)
        # 1x1-conv FFN (ReLU, bias-free)
        y = mm(jnp.maximum(mm(x1, ffn_w1_ref[l]), 0.0), ffn_w2_ref[l])
        # decomp2(x1 + y)
        s2 = x1 + y
        x = s2 - mm(ma, s2)

    # ---- SeasonalLayerNorm: LayerNorm(d_model) then subtract the time mean ----
    mu = jnp.mean(x, axis=-1, keepdims=True)
    var = jnp.mean((x - mu) ** 2, axis=-1, keepdims=True)
    gamma = norm_gb_ref[0:1, :]
    beta = norm_gb_ref[1:2, :]
    xh = (x - mu) * lax.rsqrt(var + LN_EPS) * gamma + beta
    enc = xh - jnp.mean(xh, axis=0, keepdims=True)                 # [L, D]

    # ---- output projection + imputation mix (lane-dense, padded to OUT_PAD) --
    recon = mm(enc, out_w_ref[...]) + out_b_ref[...]               # [L, OUT_PAD]
    m = mpad_ref[...]
    o_ref[...] = m * xpad_ref[...] + (1.0 - m) * recon


# --------------------------------- glue --------------------------------------
def moving_avg_matrix(L, win):
    """A with (A @ x)[t] = mean_j x[clamp(t+j-pad, 0, L-1)] — exactly torch's
    edge-repeat padding + AvgPool1d(k=win, stride=1)."""
    pad = (win - 1) // 2
    A = np.zeros((L, L), dtype=np.float32)
    for t in range(L):
        for j in range(win):
            s = min(max(t + j - pad, 0), L - 1)
            A[t, s] += 1.0 / win
    return A


def init_params(key):
    L, D, F = N_STEPS, D_MODEL, N_FEATURES
    keys = iter(jax.random.split(key, 4 + 10 * N_LAYERS))

    def dense_w(k, fi, fo):
        return jax.random.normal(k, (fi, fo), jnp.float32) / np.sqrt(fi)

    def dense_b(k, fo):
        return jax.random.normal(k, (1, fo), jnp.float32) * 0.02

    emb_w = dense_w(next(keys), 2 * F, D)
    emb_b = dense_b(next(keys), D)

    qkvo_w, qkvo_b, w1, w2 = [], [], [], []
    for _ in range(N_LAYERS):
        wq = dense_w(next(keys), D, D); bq = dense_b(next(keys), D)
        wk = dense_w(next(keys), D, D); bk = dense_b(next(keys), D)
        wv = dense_w(next(keys), D, D); bv = dense_b(next(keys), D)
        wo = dense_w(next(keys), D, D); bo = dense_b(next(keys), D)
        qkvo_w.append(jnp.concatenate([wq, wk, wv, wo], axis=1))   # [D, 4D]
        qkvo_b.append(jnp.concatenate([bq, bk, bv, bo], axis=1))   # [1, 4D]
        w1.append(dense_w(next(keys), D, D_FFN))    # Conv1d(k=1, bias=False)
        w2.append(dense_w(next(keys), D_FFN, D))    # Conv1d(k=1, bias=False)
    out_w = dense_w(next(keys), D, F)
    out_b = dense_b(next(keys), F)

    ma = jnp.asarray(moving_avg_matrix(L, MOVING_AVG_WIN))

    bf16 = jnp.bfloat16
    return {
        "emb_w": emb_w.astype(bf16),
        "emb_b": emb_b,
        "qkvo_w": jnp.stack(qkvo_w).astype(bf16),                  # [NL, D, 4D]
        "qkvo_b": jnp.stack(qkvo_b),                               # [NL, 1, 4D]
        "ffn_w1": jnp.stack(w1).astype(bf16),                      # [NL, D, D_FFN]
        "ffn_w2": jnp.stack(w2).astype(bf16),                      # [NL, D_FFN, D]
        "norm_gb": jnp.concatenate(
            [jnp.ones((1, D), jnp.float32), jnp.zeros((1, D), jnp.float32)], 0),
        "ma_mat": ma.astype(bf16),                                 # [L, L]
        "out_w": jnp.zeros((D, OUT_PAD), jnp.float32).at[:, :F].set(out_w).astype(bf16),
        "out_b": jnp.zeros((1, OUT_PAD), jnp.float32).at[:, :F].set(out_b),
    }


def autoformer_forward(params, X, missing_mask):
    """Eval-mode forward of _Autoformer: returns imputed_data [B, L, F]."""
    B, L, F = X.shape
    D = D_MODEL
    xm = jnp.concatenate([X, missing_mask], axis=-1)               # [B, L, 2F]
    xpad = jnp.pad(X, ((0, 0), (0, 0), (0, OUT_PAD - F)))
    mpad = jnp.pad(missing_mask, ((0, 0), (0, 0), (0, OUT_PAD - F)))

    bmap = lambda b: (b, 0, 0)       # per-batch blocks
    wmap2 = lambda b: (0, 0)         # whole-array weights (fetched once)
    wmap3 = lambda b: (0, 0, 0)

    in_specs = [
        pl.BlockSpec((None, L, 2 * F), bmap),
        pl.BlockSpec((None, L, OUT_PAD), bmap),
        pl.BlockSpec((None, L, OUT_PAD), bmap),
        pl.BlockSpec((2 * F, D), wmap2),
        pl.BlockSpec((1, D), wmap2),
        pl.BlockSpec((N_LAYERS, D, 4 * D), wmap3),
        pl.BlockSpec((N_LAYERS, 1, 4 * D), wmap3),
        pl.BlockSpec((N_LAYERS, D, D_FFN), wmap3),
        pl.BlockSpec((N_LAYERS, D_FFN, D), wmap3),
        pl.BlockSpec((2, D), wmap2),
        pl.BlockSpec((L, L), wmap2),
        pl.BlockSpec((D, OUT_PAD), wmap2),
        pl.BlockSpec((1, OUT_PAD), wmap2),
    ]
    out_specs = pl.BlockSpec((None, L, OUT_PAD), bmap)

    out = pl.pallas_call(
        _autoformer_kernel,
        out_shape=jax.ShapeDtypeStruct((B, L, OUT_PAD), jnp.float32),
        grid=(B,),
        in_specs=in_specs,
        out_specs=out_specs,
        scratch_shapes=[pltpu.VMEM((2 * L, L), jnp.float32)],
        compiler_params=pltpu.CompilerParams(
            dimension_semantics=("parallel",)),
    )(
        xm, xpad, mpad,
        params["emb_w"], params["emb_b"],
        params["qkvo_w"], params["qkvo_b"],
        params["ffn_w1"], params["ffn_w2"],
        params["norm_gb"], params["ma_mat"],
        params["out_w"], params["out_b"],
    )
    return out[:, :, :F]


# --------------------------------- main ---------------------------------------
if __name__ == "__main__":
    key = jax.random.PRNGKey(0)
    kx, km, kp = jax.random.split(key, 3)

    X = jax.random.normal(kx, (BATCH, N_STEPS, N_FEATURES), jnp.float32)
    missing_mask = (
        jax.random.uniform(km, (BATCH, N_STEPS, N_FEATURES)) > 0.2
    ).astype(jnp.float32)
    X = X * missing_mask  # observed entries only, as PyPOTS feeds the model

    params = init_params(kp)

    fwd = jax.jit(autoformer_forward)
    imputed = fwd(params, X, missing_mask)
    imputed = jax.block_until_ready(imputed)

    assert imputed.shape == (BATCH, N_STEPS, N_FEATURES)
    assert bool(jnp.all(jnp.isfinite(imputed)))
    # observed positions must pass X through unchanged
    assert bool(
        jnp.allclose(jnp.where(missing_mask > 0, imputed, 0.0),
                     jnp.where(missing_mask > 0, X, 0.0), atol=1e-5)
    )
    print("KERNEL_OK")
</pallas_src>

<mosaic_0001>
module attributes {stable_mosaic.version = 11 : i64} {
  func.func @_autoformer_kernel(%arg0: i32, %arg1: memref<1x16x8xf32, #tpu.memory_space<vmem>>, %arg2: memref<1x16x128xf32, #tpu.memory_space<vmem>>, %arg3: memref<1x16x128xf32, #tpu.memory_space<vmem>>, %arg4: memref<8x32xbf16, #tpu.memory_space<vmem>>, %arg5: memref<1x32xf32, #tpu.memory_space<vmem>>, %arg6: memref<2x32x128xbf16, #tpu.memory_space<vmem>>, %arg7: memref<2x1x128xf32, #tpu.memory_space<vmem>>, %arg8: memref<2x32x64xbf16, #tpu.memory_space<vmem>>, %arg9: memref<2x64x32xbf16, #tpu.memory_space<vmem>>, %arg10: memref<2x32xf32, #tpu.memory_space<vmem>>, %arg11: memref<16x16xbf16, #tpu.memory_space<vmem>>, %arg12: memref<32x128xbf16, #tpu.memory_space<vmem>>, %arg13: memref<1x128xf32, #tpu.memory_space<vmem>>, %arg14: memref<1x16x128xf32, #tpu.memory_space<vmem>>, %arg15: memref<32x16xf32, #tpu.memory_space<vmem>>) attributes {dimension_semantics = [#tpu.dimension_semantics<parallel>], iteration_bounds = array<i64: 2>, scalar_prefetch = 0 : i64, scratch_operands = 1 : i64, tpu.core_type = #tpu.core_type<tc>, window_params = [{transform_indices = @transform_0, window_bounds = array<i64: 1, 16, 8>}, {transform_indices = @transform_1, window_bounds = array<i64: 1, 16, 128>}, {transform_indices = @transform_2, window_bounds = array<i64: 1, 16, 128>}, {pipeline_mode = #tpu.pipeline_mode<synchronous>, transform_indices = @transform_3, window_bounds = array<i64: 8, 32>}, {pipeline_mode = #tpu.pipeline_mode<synchronous>, transform_indices = @transform_4, window_bounds = array<i64: 1, 32>}, {pipeline_mode = #tpu.pipeline_mode<synchronous>, transform_indices = @transform_5, window_bounds = array<i64: 2, 32, 128>}, {pipeline_mode = #tpu.pipeline_mode<synchronous>, transform_indices = @transform_6, window_bounds = array<i64: 2, 1, 128>}, {pipeline_mode = #tpu.pipeline_mode<synchronous>, transform_indices = @transform_7, window_bounds = array<i64: 2, 32, 64>}, {pipeline_mode = #tpu.pipeline_mode<synchronous>, transform_indices = @transform_8, window_bounds = array<i64: 2, 64, 32>}, {pipeline_mode = #tpu.pipeline_mode<synchronous>, transform_indices = @transform_9, window_bounds = array<i64: 2, 32>}, {pipeline_mode = #tpu.pipeline_mode<synchronous>, transform_indices = @transform_10, window_bounds = array<i64: 16, 16>}, {pipeline_mode = #tpu.pipeline_mode<synchronous>, transform_indices = @transform_11, window_bounds = array<i64: 32, 128>}, {pipeline_mode = #tpu.pipeline_mode<synchronous>, transform_indices = @transform_12, window_bounds = array<i64: 1, 128>}, {transform_indices = @transform_13, window_bounds = array<i64: 1, 16, 128>}]} {
    %0 = tpu.iota {dimensions = array<i32: 0>} : vector<16x16xi32>
    %1 = arith.sitofp %0 : vector<16x16xi32> to vector<16x16xf32>
    %2 = tpu.iota {dimensions = array<i32: 1>} : vector<16x16xi32>
    %3 = arith.sitofp %2 : vector<16x16xi32> to vector<16x16xf32>
    %4 = tpu.iota {dimensions = array<i32: 0>} : vector<16x1xi32>
    %5 = arith.sitofp %4 : vector<16x1xi32> to vector<16x1xf32>
    %c0 = arith.constant 0 : index
    %c0_0 = arith.constant 0 : index
    %6 = vector.load %arg11[%c0, %c0_0] : memref<16x16xbf16, #tpu.memory_space<vmem>>, vector<16x16xbf16>
    %c0_1 = arith.constant 0 : index
    %c0_2 = arith.constant 0 : index
    %c0_3 = arith.constant 0 : index
    %7 = vector.load %arg1[%c0_1, %c0_2, %c0_3] : memref<1x16x8xf32, #tpu.memory_space<vmem>>, vector<1x16x8xf32>
    %8 = vector.shape_cast %7 : vector<1x16x8xf32> to vector<16x8xf32>
    %c0_4 = arith.constant 0 : index
    %c0_5 = arith.constant 0 : index
    %9 = vector.load %arg4[%c0_4, %c0_5] : memref<8x32xbf16, #tpu.memory_space<vmem>>, vector<8x32xbf16>
    %10 = arith.truncf %8 : vector<16x8xf32> to vector<16x8xbf16>
    %cst = arith.constant dense<0.000000e+00> : vector<16x32xf32>
    %11 = tpu.matmul %10, %9, %cst {dimension_numbers = #tpu.dot_dimension_numbers<[1], [0], [0], [1], [0, 0, 1, 1], [], []>} : vector<16x8xbf16>, vector<8x32xbf16>, vector<16x32xf32> -> vector<16x32xf32>
    %c0_6 = arith.constant 0 : index
    %c0_7 = arith.constant 0 : index
    %12 = vector.load %arg5[%c0_6, %c0_7] : memref<1x32xf32, #tpu.memory_space<vmem>>, vector<1x32xf32>
    %13 = vector.broadcast %12 : vector<1x32xf32> to vector<16x32xf32>
    %14 = arith.addf %11, %13 : vector<16x32xf32>
    %c0_8 = arith.constant 0 : index
    %c0_9 = arith.constant 0 : index
    %c0_10 = arith.constant 0 : index
    %15 = vector.load %arg6[%c0_8, %c0_9, %c0_10] : memref<2x32x128xbf16, #tpu.memory_space<vmem>>, vector<1x32x96xbf16>
    %16 = vector.shape_cast %15 : vector<1x32x96xbf16> to vector<32x96xbf16>
    %c0_11 = arith.constant 0 : index
    %c0_12 = arith.constant 0 : index
    %c96 = arith.constant 96 : index
    %17 = vector.load %arg6[%c0_11, %c0_12, %c96] : memref<2x32x128xbf16, #tpu.memory_space<vmem>>, vector<1x32x32xbf16>
    %18 = vector.shape_cast %17 : vector<1x32x32xbf16> to vector<32x32xbf16>
    %c0_13 = arith.constant 0 : index
    %c0_14 = arith.constant 0 : index
    %c0_15 = arith.constant 0 : index
    %19 = vector.load %arg7[%c0_13, %c0_14, %c0_15] : memref<2x1x128xf32, #tpu.memory_space<vmem>>, vector<1x1x96xf32>
    %20 = vector.shape_cast %19 : vector<1x1x96xf32> to vector<1x96xf32>
    %c0_16 = arith.constant 0 : index
    %c0_17 = arith.constant 0 : index
    %c96_18 = arith.constant 96 : index
    %21 = vector.load %arg7[%c0_16, %c0_17, %c96_18] : memref<2x1x128xf32, #tpu.memory_space<vmem>>, vector<1x1x32xf32>
    %22 = vector.shape_cast %21 : vector<1x1x32xf32> to vector<1x32xf32>
    %23 = arith.truncf %14 : vector<16x32xf32> to vector<16x32xbf16>
    %cst_19 = arith.constant dense<0.000000e+00> : vector<16x96xf32>
    %24 = tpu.matmul %23, %16, %cst_19 {dimension_numbers = #tpu.dot_dimension_numbers<[1], [0], [0], [1], [0, 0, 1, 1], [], []>} : vector<16x32xbf16>, vector<32x96xbf16>, vector<16x96xf32> -> vector<16x96xf32>
    %25 = vector.broadcast %20 : vector<1x96xf32> to vector<16x96xf32>
    %26 = arith.addf %24, %25 : vector<16x96xf32>
    %27 = vector.extract_strided_slice %26 {offsets = [0, 0], sizes = [16, 32], strides = [1, 1]} : vector<16x96xf32> to vector<16x32xf32>
    %28 = vector.extract_strided_slice %26 {offsets = [0, 32], sizes = [16, 32], strides = [1, 1]} : vector<16x96xf32> to vector<16x32xf32>
    %29 = vector.extract_strided_slice %26 {offsets = [0, 64], sizes = [16, 32], strides = [1, 1]} : vector<16x96xf32> to vector<16x32xf32>
    %30 = arith.truncf %27 : vector<16x32xf32> to vector<16x32xbf16>
    %31 = arith.truncf %28 : vector<16x32xf32> to vector<16x32xbf16>
    %cst_20 = arith.constant dense<0.000000e+00> : vector<16x16xf32>
    %32 = tpu.matmul %30, %31, %cst_20 {dimension_numbers = #tpu.dot_dimension_numbers<[1], [1], [0], [0], [0, 0, 1, 0], [], []>} : vector<16x32xbf16>, vector<16x32xbf16>, vector<16x16xf32> -> vector<16x16xf32>
    %c0_21 = arith.constant 0 : index
    %c0_22 = arith.constant 0 : index
    %33 = vector.load %arg15[%c0_21, %c0_22] : memref<32x16xf32, #tpu.memory_space<vmem>>, vector<16x16xf32>
    tpu.vector_store %arg15[%c0_21, %c0_22], %32 {strides = array<i32>} : memref<32x16xf32, #tpu.memory_space<vmem>>, vector<16x16xf32>,
    %c16 = arith.constant 16 : index
    %c0_23 = arith.constant 0 : index
    %34 = vector.load %arg15[%c16, %c0_23] : memref<32x16xf32, #tpu.memory_space<vmem>>, vector<16x16xf32>
    tpu.vector_store %arg15[%c16, %c0_23], %32 {strides = array<i32>} : memref<32x16xf32, #tpu.memory_space<vmem>>, vector<16x16xf32>,
    %c0_24 = arith.constant 0 : index
    %c0_25 = arith.constant 0 : index
    %35 = vector.load %arg15[%c0_24, %c0_25] : memref<32x16xf32, #tpu.memory_space<vmem>>, vector<16x1xf32>
    %c1 = arith.constant 1 : index
    %c1_26 = arith.constant 1 : index
    %36 = vector.load %arg15[%c1, %c1_26] : memref<32x16xf32, #tpu.memory_space<vmem>>, vector<16x1xf32>
    %37 = arith.addf %35, %36 : vector<16x1xf32>
    %c2 = arith.constant 2 : index
    %c2_27 = arith.constant 2 : index
    %38 = vector.load %arg15[%c2, %c2_27] : memref<32x16xf32, #tpu.memory_space<vmem>>, vector<16x1xf32>
    %39 = arith.addf %37, %38 : vector<16x1xf32>
    %c3 = arith.constant 3 : index
    %c3_28 = arith.constant 3 : index
    %40 = vector.load %arg15[%c3, %c3_28] : memref<32x16xf32, #tpu.memory_space<vmem>>, vector<16x1xf32>
    %41 = arith.addf %39, %40 : vector<16x1xf32>
    %c4 = arith.constant 4 : index
    %c4_29 = arith.constant 4 : index
    %42 = vector.load %arg15[%c4, %c4_29] : memref<32x16xf32, #tpu.memory_space<vmem>>, vector<16x1xf32>
    %43 = arith.addf %41, %42 : vector<16x1xf32>
    %c5 = arith.constant 5 : index
    %c5_30 = arith.constant 5 : index
    %44 = vector.load %arg15[%c5, %c5_30] : memref<32x16xf32, #tpu.memory_space<vmem>>, vector<16x1xf32>
    %45 = arith.addf %43, %44 : vector<16x1xf32>
    %c6 = arith.constant 6 : index
    %c6_31 = arith.constant 6 : index
    %46 = vector.load %arg15[%c6, %c6_31] : memref<32x16xf32, #tpu.memory_space<vmem>>, vector<16x1xf32>
    %47 = arith.addf %45, %46 : vector<16x1xf32>
    %c7 = arith.constant 7 : index
    %c7_32 = arith.constant 7 : index
    %48 = vector.load %arg15[%c7, %c7_32] : memref<32x16xf32, #tpu.memory_space<vmem>>, vector<16x1xf32>
    %49 = arith.addf %47, %48 : vector<16x1xf32>
    %c8 = arith.constant 8 : index
    %c8_33 = arith.constant 8 : index
    %50 = vector.load %arg15[%c8, %c8_33] : memref<32x16xf32, #tpu.memory_space<vmem>>, vector<16x1xf32>
    %51 = arith.addf %49, %50 : vector<16x1xf32>
    %c9 = arith.constant 9 : index
    %c9_34 = arith.constant 9 : index
    %52 = vector.load %arg15[%c9, %c9_34] : memref<32x16xf32, #tpu.memory_space<vmem>>, vector<16x1xf32>
    %53 = arith.addf %51, %52 : vector<16x1xf32>
    %c10 = arith.constant 10 : index
    %c10_35 = arith.constant 10 : index
    %54 = vector.load %arg15[%c10, %c10_35] : memref<32x16xf32, #tpu.memory_space<vmem>>, vector<16x1xf32>
    %55 = arith.addf %53, %54 : vector<16x1xf32>
    %c11 = arith.constant 11 : index
    %c11_36 = arith.constant 11 : index
    %56 = vector.load %arg15[%c11, %c11_36] : memref<32x16xf32, #tpu.memory_space<vmem>>, vector<16x1xf32>
    %57 = arith.addf %55, %56 : vector<16x1xf32>
    %c12 = arith.constant 12 : index
    %c12_37 = arith.constant 12 : index
    %58 = vector.load %arg15[%c12, %c12_37] : memref<32x16xf32, #tpu.memory_space<vmem>>, vector<16x1xf32>
    %59 = arith.addf %57, %58 : vector<16x1xf32>
    %c13 = arith.constant 13 : index
    %c13_38 = arith.constant 13 : index
    %60 = vector.load %arg15[%c13, %c13_38] : memref<32x16xf32, #tpu.memory_space<vmem>>, vector<16x1xf32>
    %61 = arith.addf %59, %60 : vector<16x1xf32>
    %c14 = arith.constant 14 : index
    %c14_39 = arith.constant 14 : index
    %62 = vector.load %arg15[%c14, %c14_39] : memref<32x16xf32, #tpu.memory_space<vmem>>, vector<16x1xf32>
    %63 = arith.addf %61, %62 : vector<16x1xf32>
    %c15 = arith.constant 15 : index
    %c15_40 = arith.constant 15 : index
    %64 = vector.load %arg15[%c15, %c15_40] : memref<32x16xf32, #tpu.memory_space<vmem>>, vector<16x1xf32>
    %65 = arith.addf %63, %64 : vector<16x1xf32>
    %cst_41 = arith.constant 3.125000e-02 : f32
    %66 = vector.broadcast %cst_41 : f32 to vector<16x1xf32>
    %67 = arith.mulf %65, %66 : vector<16x1xf32>
    %68 = vector.shape_cast %67 : vector<16x1xf32> to vector<1x16x1xf32>
    %cst_42 = arith.constant dense<0xFF800000> : vector<1xf32>
    %69 = vector.multi_reduction <maximumf>, %68, %cst_42 [1, 2] : vector<1x16x1xf32> to vector<1xf32>
    %70 = vector.shape_cast %69 : vector<1xf32> to vector<1x1x1xf32>
    %71 = vector.extract %70[0, 0, 0] : f32 from vector<1x1x1xf32>
    %72 = vector.broadcast %71 : f32 to vector<16x1xf32>
    %73 = arith.subf %67, %72 : vector<16x1xf32>
    %74 = math.exp %73 : vector<16x1xf32>
    %cst_43 = arith.constant 0.000000e+00 : f32
    %75 = vector.broadcast %cst_43 : f32 to vector<16x16xf32>
    %cst_44 = arith.constant 0.000000e+00 : f32
    %76 = vector.broadcast %cst_44 : f32 to vector<1x1xf32>
    %77 = vector.shape_cast %67 : vector<16x1xf32> to vector<1x16x1xf32>
    %cst_45 = arith.constant dense<0xFF800000> : vector<1xf32>
    %78 = vector.multi_reduction <maximumf>, %77, %cst_45 [1, 2] : vector<1x16x1xf32> to vector<1xf32>
    %79 = vector.shape_cast %78 : vector<1xf32> to vector<1x1x1xf32>
    %80 = vector.extract %79[0, 0, 0] : f32 from vector<1x1x1xf32>
    %81 = vector.broadcast %80 : f32 to vector<16x1xf32>
    %82 = arith.cmpf oeq, %67, %81 : vector<16x1xf32>
    %cst_46 = arith.constant 1.600000e+01 : f32
    %83 = vector.broadcast %cst_46 : f32 to vector<16x1xf32>
    %84 = arith.select %82, %5, %83 : vector<16x1xi1>, vector<16x1xf32>
    %85 = vector.shape_cast %84 : vector<16x1xf32> to vector<1x16x1xf32>
    %cst_47 = arith.constant dense<0x7F800000> : vector<1xf32>
    %86 = vector.multi_reduction <minimumf>, %85, %cst_47 [1, 2] : vector<1x16x1xf32> to vector<1xf32>
    %87 = vector.shape_cast %86 : vector<1xf32> to vector<1x1x1xf32>
    %88 = vector.extract %87[0, 0, 0] : f32 from vector<1x1x1xf32>
    %89 = vector.broadcast %88 : f32 to vector<16x1xf32>
    %90 = arith.cmpf oeq, %5, %89 : vector<16x1xf32>
    %cst_48 = arith.constant 0.000000e+00 : f32
    %91 = vector.broadcast %cst_48 : f32 to vector<16x1xf32>
    %92 = arith.select %90, %74, %91 : vector<16x1xi1>, vector<16x1xf32>
    %93 = vector.shape_cast %92 : vector<16x1xf32> to vector<1x16x1xf32>
    %cst_49 = arith.constant dense<0.000000e+00> : vector<1xf32>
    %94 = vector.multi_reduction <add>, %93, %cst_49 [1, 2] : vector<1x16x1xf32> to vector<1xf32>
    %95 = vector.shape_cast %94 : vector<1xf32> to vector<1x1x1xf32>
    %96 = vector.extract %95[0, 0, 0] : f32 from vector<1x1x1xf32>
    %97 = vector.broadcast %88 : f32 to vector<16x16xf32>
    %98 = arith.addf %1, %97 : vector<16x16xf32>
    %cst_50 = arith.constant 1.600000e+01 : f32
    %99 = vector.broadcast %cst_50 : f32 to vector<16x16xf32>
    %100 = arith.cmpf oge, %98, %99 : vector<16x16xf32>
    %cst_51 = arith.constant 1.600000e+01 : f32
    %101 = vector.broadcast %cst_51 : f32 to vector<16x16xf32>
    %102 = arith.subf %98, %101 : vector<16x16xf32>
    %103 = arith.select %100, %102, %98 : vector<16x16xi1>, vector<16x16xf32>
    %104 = arith.cmpf oeq, %103, %3 : vector<16x16xf32>
    %105 = arith.extui %104 : vector<16x16xi1> to vector<16x16xi32>
    %106 = arith.sitofp %105 : vector<16x16xi32> to vector<16x16xf32>
    %107 = vector.broadcast %96 : f32 to vector<16x16xf32>
    %108 = arith.mulf %107, %106 : vector<16x16xf32>
    %109 = arith.addf %75, %108 : vector<16x16xf32>
    %110 = vector.broadcast %96 : f32 to vector<1x1xf32>
    %111 = arith.addf %76, %110 : vector<1x1xf32>
    %112 = vector.broadcast %88 : f32 to vector<16x1xf32>
    %113 = arith.cmpf oeq, %5, %112 : vector<16x1xf32>
    %cst_52 = arith.constant -1.000000e+30 : f32
    %114 = vector.broadcast %cst_52 : f32 to vector<16x1xf32>
    %115 = arith.select %113, %114, %67 : vector<16x1xi1>, vector<16x1xf32>
    %116 = vector.shape_cast %115 : vector<16x1xf32> to vector<1x16x1xf32>
    %cst_53 = arith.constant dense<0xFF800000> : vector<1xf32>
    %117 = vector.multi_reduction <maximumf>, %116, %cst_53 [1, 2] : vector<1x16x1xf32> to vector<1xf32>
    %118 = vector.shape_cast %117 : vector<1xf32> to vector<1x1x1xf32>
    %119 = vector.extract %118[0, 0, 0] : f32 from vector<1x1x1xf32>
    %120 = vector.broadcast %119 : f32 to vector<16x1xf32>
    %121 = arith.cmpf oeq, %115, %120 : vector<16x1xf32>
    %cst_54 = arith.constant 1.600000e+01 : f32
    %122 = vector.broadcast %cst_54 : f32 to vector<16x1xf32>
    %123 = arith.select %121, %5, %122 : vector<16x1xi1>, vector<16x1xf32>
    %124 = vector.shape_cast %123 : vector<16x1xf32> to vector<1x16x1xf32>
    %cst_55 = arith.constant dense<0x7F800000> : vector<1xf32>
    %125 = vector.multi_reduction <minimumf>, %124, %cst_55 [1, 2] : vector<1x16x1xf32> to vector<1xf32>
    %126 = vector.shape_cast %125 : vector<1xf32> to vector<1x1x1xf32>
    %127 = vector.extract %126[0, 0, 0] : f32 from vector<1x1x1xf32>
    %128 = vector.broadcast %127 : f32 to vector<16x1xf32>
    %129 = arith.cmpf oeq, %5, %128 : vector<16x1xf32>
    %cst_56 = arith.constant 0.000000e+00 : f32
    %130 = vector.broadcast %cst_56 : f32 to vector<16x1xf32>
    %131 = arith.select %129, %74, %130 : vector<16x1xi1>, vector<16x1xf32>
    %132 = vector.shape_cast %131 : vector<16x1xf32> to vector<1x16x1xf32>
    %cst_57 = arith.constant dense<0.000000e+00> : vector<1xf32>
    %133 = vector.multi_reduction <add>, %132, %cst_57 [1, 2] : vector<1x16x1xf32> to vector<1xf32>
    %134 = vector.shape_cast %133 : vector<1xf32> to vector<1x1x1xf32>
    %135 = vector.extract %134[0, 0, 0] : f32 from vector<1x1x1xf32>
    %136 = vector.broadcast %127 : f32 to vector<16x16xf32>
    %137 = arith.addf %1, %136 : vector<16x16xf32>
    %cst_58 = arith.constant 1.600000e+01 : f32
    %138 = vector.broadcast %cst_58 : f32 to vector<16x16xf32>
    %139 = arith.cmpf oge, %137, %138 : vector<16x16xf32>
    %cst_59 = arith.constant 1.600000e+01 : f32
    %140 = vector.broadcast %cst_59 : f32 to vector<16x16xf32>
    %141 = arith.subf %137, %140 : vector<16x16xf32>
    %142 = arith.select %139, %141, %137 : vector<16x16xi1>, vector<16x16xf32>
    %143 = arith.cmpf oeq, %142, %3 : vector<16x16xf32>
    %144 = arith.extui %143 : vector<16x16xi1> to vector<16x16xi32>
    %145 = arith.sitofp %144 : vector<16x16xi32> to vector<16x16xf32>
    %146 = vector.broadcast %135 : f32 to vector<16x16xf32>
    %147 = arith.mulf %146, %145 : vector<16x16xf32>
    %148 = arith.addf %109, %147 : vector<16x16xf32>
    %149 = vector.broadcast %135 : f32 to vector<1x1xf32>
    %150 = arith.addf %111, %149 : vector<1x1xf32>
    %151 = tpu.reciprocal %150 {approx = true} : vector<1x1xf32> -> vector<1x1xf32>
    %152 = vector.broadcast %151 : vector<1x1xf32> to vector<16x16xf32>
    %153 = arith.mulf %148, %152 : vector<16x16xf32>
    %154 = arith.truncf %153 : vector<16x16xf32> to vector<16x16xbf16>
    %155 = arith.truncf %29 : vector<16x32xf32> to vector<16x32xbf16>
    %cst_60 = arith.constant dense<0.000000e+00> : vector<16x32xf32>
    %156 = tpu.matmul %154, %155, %cst_60 {dimension_numbers = #tpu.dot_dimension_numbers<[1], [0], [0], [1], [0, 0, 1, 1], [], []>} : vector<16x16xbf16>, vector<16x32xbf16>, vector<16x32xf32> -> vector<16x32xf32>
    %157 = arith.truncf %156 : vector<16x32xf32> to vector<16x32xbf16>
    %cst_61 = arith.constant dense<0.000000e+00> : vector<16x32xf32>
    %158 = tpu.matmul %157, %18, %cst_61 {dimension_numbers = #tpu.dot_dimension_numbers<[1], [0], [0], [1], [0, 0, 1, 1], [], []>} : vector<16x32xbf16>, vector<32x32xbf16>, vector<16x32xf32> -> vector<16x32xf32>
    %159 = vector.broadcast %22 : vector<1x32xf32> to vector<16x32xf32>
    %160 = arith.addf %158, %159 : vector<16x32xf32>
    %161 = arith.addf %14, %160 : vector<16x32xf32>
    %162 = arith.truncf %161 : vector<16x32xf32> to vector<16x32xbf16>
    %cst_62 = arith.constant dense<0.000000e+00> : vector<16x32xf32>
    %163 = tpu.matmul %6, %162, %cst_62 {dimension_numbers = #tpu.dot_dimension_numbers<[1], [0], [0], [1], [0, 0, 1, 1], [], []>} : vector<16x16xbf16>, vector<16x32xbf16>, vector<16x32xf32> -> vector<16x32xf32>
    %164 = arith.subf %161, %163 : vector<16x32xf32>
    %c0_63 = arith.constant 0 : index
    %c0_64 = arith.constant 0 : index
    %c0_65 = arith.constant 0 : index
    %165 = vector.load %arg8[%c0_63, %c0_64, %c0_65] : memref<2x32x64xbf16, #tpu.memory_space<vmem>>, vector<1x32x64xbf16>
    %166 = vector.shape_cast %165 : vector<1x32x64xbf16> to vector<32x64xbf16>
    %167 = arith.truncf %164 : vector<16x32xf32> to vector<16x32xbf16>
    %cst_66 = arith.constant dense<0.000000e+00> : vector<16x64xf32>
    %168 = tpu.matmul %167, %166, %cst_66 {dimension_numbers = #tpu.dot_dimension_numbers<[1], [0], [0], [1], [0, 0, 1, 1], [], []>} : vector<16x32xbf16>, vector<32x64xbf16>, vector<16x64xf32> -> vector<16x64xf32>
    %cst_67 = arith.constant 0.000000e+00 : f32
    %169 = vector.broadcast %cst_67 : f32 to vector<16x64xf32>
    %170 = arith.maximumf %168, %169 : vector<16x64xf32>
    %c0_68 = arith.constant 0 : index
    %c0_69 = arith.constant 0 : index
    %c0_70 = arith.constant 0 : index
    %171 = vector.load %arg9[%c0_68, %c0_69, %c0_70] : memref<2x64x32xbf16, #tpu.memory_space<vmem>>, vector<1x64x32xbf16>
    %172 = vector.shape_cast %171 : vector<1x64x32xbf16> to vector<64x32xbf16>
    %173 = arith.truncf %170 : vector<16x64xf32> to vector<16x64xbf16>
    %cst_71 = arith.constant dense<0.000000e+00> : vector<16x32xf32>
    %174 = tpu.matmul %173, %172, %cst_71 {dimension_numbers = #tpu.dot_dimension_numbers<[1], [0], [0], [1], [0, 0, 1, 1], [], []>} : vector<16x64xbf16>, vector<64x32xbf16>, vector<16x32xf32> -> vector<16x32xf32>
    %175 = arith.addf %164, %174 : vector<16x32xf32>
    %176 = arith.truncf %175 : vector<16x32xf32> to vector<16x32xbf16>
    %cst_72 = arith.constant dense<0.000000e+00> : vector<16x32xf32>
    %177 = tpu.matmul %6, %176, %cst_72 {dimension_numbers = #tpu.dot_dimension_numbers<[1], [0], [0], [1], [0, 0, 1, 1], [], []>} : vector<16x16xbf16>, vector<16x32xbf16>, vector<16x32xf32> -> vector<16x32xf32>
    %178 = arith.subf %175, %177 : vector<16x32xf32>
    %c1_73 = arith.constant 1 : index
    %c0_74 = arith.constant 0 : index
    %c0_75 = arith.constant 0 : index
    %179 = vector.load %arg6[%c1_73, %c0_74, %c0_75] : memref<2x32x128xbf16, #tpu.memory_space<vmem>>, vector<1x32x96xbf16>
    %180 = vector.shape_cast %179 : vector<1x32x96xbf16> to vector<32x96xbf16>
    %c1_76 = arith.constant 1 : index
    %c0_77 = arith.constant 0 : index
    %c96_78 = arith.constant 96 : index
    %181 = vector.load %arg6[%c1_76, %c0_77, %c96_78] : memref<2x32x128xbf16, #tpu.memory_space<vmem>>, vector<1x32x32xbf16>
    %182 = vector.shape_cast %181 : vector<1x32x32xbf16> to vector<32x32xbf16>
    %c1_79 = arith.constant 1 : index
    %c0_80 = arith.constant 0 : index
    %c0_81 = arith.constant 0 : index
    %183 = vector.load %arg7[%c1_79, %c0_80, %c0_81] : memref<2x1x128xf32, #tpu.memory_space<vmem>>, vector<1x1x96xf32>
    %184 = vector.shape_cast %183 : vector<1x1x96xf32> to vector<1x96xf32>
    %c1_82 = arith.constant 1 : index
    %c0_83 = arith.constant 0 : index
    %c96_84 = arith.constant 96 : index
    %185 = vector.load %arg7[%c1_82, %c0_83, %c96_84] : memref<2x1x128xf32, #tpu.memory_space<vmem>>, vector<1x1x32xf32>
    %186 = vector.shape_cast %185 : vector<1x1x32xf32> to vector<1x32xf32>
    %187 = arith.truncf %178 : vector<16x32xf32> to vector<16x32xbf16>
    %cst_85 = arith.constant dense<0.000000e+00> : vector<16x96xf32>
    %188 = tpu.matmul %187, %180, %cst_85 {dimension_numbers = #tpu.dot_dimension_numbers<[1], [0], [0], [1], [0, 0, 1, 1], [], []>} : vector<16x32xbf16>, vector<32x96xbf16>, vector<16x96xf32> -> vector<16x96xf32>
    %189 = vector.broadcast %184 : vector<1x96xf32> to vector<16x96xf32>
    %190 = arith.addf %188, %189 : vector<16x96xf32>
    %191 = vector.extract_strided_slice %190 {offsets = [0, 0], sizes = [16, 32], strides = [1, 1]} : vector<16x96xf32> to vector<16x32xf32>
    %192 = vector.extract_strided_slice %190 {offsets = [0, 32], sizes = [16, 32], strides = [1, 1]} : vector<16x96xf32> to vector<16x32xf32>
    %193 = vector.extract_strided_slice %190 {offsets = [0, 64], sizes = [16, 32], strides = [1, 1]} : vector<16x96xf32> to vector<16x32xf32>
    %194 = arith.truncf %191 : vector<16x32xf32> to vector<16x32xbf16>
    %195 = arith.truncf %192 : vector<16x32xf32> to vector<16x32xbf16>
    %cst_86 = arith.constant dense<0.000000e+00> : vector<16x16xf32>
    %196 = tpu.matmul %194, %195, %cst_86 {dimension_numbers = #tpu.dot_dimension_numbers<[1], [1], [0], [0], [0, 0, 1, 0], [], []>} : vector<16x32xbf16>, vector<16x32xbf16>, vector<16x16xf32> -> vector<16x16xf32>
    %c0_87 = arith.constant 0 : index
    %c0_88 = arith.constant 0 : index
    %197 = vector.load %arg15[%c0_87, %c0_88] : memref<32x16xf32, #tpu.memory_space<vmem>>, vector<16x16xf32>
    tpu.vector_store %arg15[%c0_87, %c0_88], %196 {strides = array<i32>} : memref<32x16xf32, #tpu.memory_space<vmem>>, vector<16x16xf32>,
    %c16_89 = arith.constant 16 : index
    %c0_90 = arith.constant 0 : index
    %198 = vector.load %arg15[%c16_89, %c0_90] : memref<32x16xf32, #tpu.memory_space<vmem>>, vector<16x16xf32>
    tpu.vector_store %arg15[%c16_89, %c0_90], %196 {strides = array<i32>} : memref<32x16xf32, #tpu.memory_space<vmem>>, vector<16x16xf32>,
    %c0_91 = arith.constant 0 : index
    %c0_92 = arith.constant 0 : index
    %199 = vector.load %arg15[%c0_91, %c0_92] : memref<32x16xf32, #tpu.memory_space<vmem>>, vector<16x1xf32>
    %c1_93 = arith.constant 1 : index
    %c1_94 = arith.constant 1 : index
    %200 = vector.load %arg15[%c1_93, %c1_94] : memref<32x16xf32, #tpu.memory_space<vmem>>, vector<16x1xf32>
    %201 = arith.addf %199, %200 : vector<16x1xf32>
    %c2_95 = arith.constant 2 : index
    %c2_96 = arith.constant 2 : index
    %202 = vector.load %arg15[%c2_95, %c2_96] : memref<32x16xf32, #tpu.memory_space<vmem>>, vector<16x1xf32>
    %203 = arith.addf %201, %202 : vector<16x1xf32>
    %c3_97 = arith.constant 3 : index
    %c3_98 = arith.constant 3 : index
    %204 = vector.load %arg15[%c3_97, %c3_98] : memref<32x16xf32, #tpu.memory_space<vmem>>, vector<16x1xf32>
    %205 = arith.addf %203, %204 : vector<16x1xf32>
    %c4_99 = arith.constant 4 : index
    %c4_100 = arith.constant 4 : index
    %206 = vector.load %arg15[%c4_99, %c4_100] : memref<32x16xf32, #tpu.memory_space<vmem>>, vector<16x1xf32>
    %207 = arith.addf %205, %206 : vector<16x1xf32>
    %c5_101 = arith.constant 5 : index
    %c5_102 = arith.constant 5 : index
    %208 = vector.load %arg15[%c5_101, %c5_102] : memref<32x16xf32, #tpu.memory_space<vmem>>, vector<16x1xf32>
    %209 = arith.addf %207, %208 : vector<16x1xf32>
    %c6_103 = arith.constant 6 : index
    %c6_104 = arith.constant 6 : index
    %210 = vector.load %arg15[%c6_103, %c6_104] : memref<32x16xf32, #tpu.memory_space<vmem>>, vector<16x1xf32>
    %211 = arith.addf %209, %210 : vector<16x1xf32>
    %c7_105 = arith.constant 7 : index
    %c7_106 = arith.constant 7 : index
    %212 = vector.load %arg15[%c7_105, %c7_106] : memref<32x16xf32, #tpu.memory_space<vmem>>, vector<16x1xf32>
    %213 = arith.addf %211, %212 : vector<16x1xf32>
    %c8_107 = arith.constant 8 : index
    %c8_108 = arith.constant 8 : index
    %214 = vector.load %arg15[%c8_107, %c8_108] : memref<32x16xf32, #tpu.memory_space<vmem>>, vector<16x1xf32>
    %215 = arith.addf %213, %214 : vector<16x1xf32>
    %c9_109 = arith.constant 9 : index
    %c9_110 = arith.constant 9 : index
    %216 = vector.load %arg15[%c9_109, %c9_110] : memref<32x16xf32, #tpu.memory_space<vmem>>, vector<16x1xf32>
    %217 = arith.addf %215, %216 : vector<16x1xf32>
    %c10_111 = arith.constant 10 : index
    %c10_112 = arith.constant 10 : index
    %218 = vector.load %arg15[%c10_111, %c10_112] : memref<32x16xf32, #tpu.memory_space<vmem>>, vector<16x1xf32>
    %219 = arith.addf %217, %218 : vector<16x1xf32>
    %c11_113 = arith.constant 11 : index
    %c11_114 = arith.constant 11 : index
    %220 = vector.load %arg15[%c11_113, %c11_114] : memref<32x16xf32, #tpu.memory_space<vmem>>, vector<16x1xf32>
    %221 = arith.addf %219, %220 : vector<16x1xf32>
    %c12_115 = arith.constant 12 : index
    %c12_116 = arith.constant 12 : index
    %222 = vector.load %arg15[%c12_115, %c12_116] : memref<32x16xf32, #tpu.memory_space<vmem>>, vector<16x1xf32>
    %223 = arith.addf %221, %222 : vector<16x1xf32>
    %c13_117 = arith.constant 13 : index
    %c13_118 = arith.constant 13 : index
    %224 = vector.load %arg15[%c13_117, %c13_118] : memref<32x16xf32, #tpu.memory_space<vmem>>, vector<16x1xf32>
    %225 = arith.addf %223, %224 : vector<16x1xf32>
    %c14_119 = arith.constant 14 : index
    %c14_120 = arith.constant 14 : index
    %226 = vector.load %arg15[%c14_119, %c14_120] : memref<32x16xf32, #tpu.memory_space<vmem>>, vector<16x1xf32>
    %227 = arith.addf %225, %226 : vector<16x1xf32>
    %c15_121 = arith.constant 15 : index
    %c15_122 = arith.constant 15 : index
    %228 = vector.load %arg15[%c15_121, %c15_122] : memref<32x16xf32, #tpu.memory_space<vmem>>, vector<16x1xf32>
    %229 = arith.addf %227, %228 : vector<16x1xf32>
    %cst_123 = arith.constant 3.125000e-02 : f32
    %230 = vector.broadcast %cst_123 : f32 to vector<16x1xf32>
    %231 = arith.mulf %229, %230 : vector<16x1xf32>
    %232 = vector.shape_cast %231 : vector<16x1xf32> to vector<1x16x1xf32>
    %cst_124 = arith.constant dense<0xFF800000> : vector<1xf32>
    %233 = vector.multi_reduction <maximumf>, %232, %cst_124 [1, 2] : vector<1x16x1xf32> to vector<1xf32>
    %234 = vector.shape_cast %233 : vector<1xf32> to vector<1x1x1xf32>
    %235 = vector.extract %234[0, 0, 0] : f32 from vector<1x1x1xf32>
    %236 = vector.broadcast %235 : f32 to vector<16x1xf32>
    %237 = arith.subf %231, %236 : vector<16x1xf32>
    %238 = math.exp %237 : vector<16x1xf32>
    %cst_125 = arith.constant 0.000000e+00 : f32
    %239 = vector.broadcast %cst_125 : f32 to vector<16x16xf32>
    %cst_126 = arith.constant 0.000000e+00 : f32
    %240 = vector.broadcast %cst_126 : f32 to vector<1x1xf32>
    %241 = vector.shape_cast %231 : vector<16x1xf32> to vector<1x16x1xf32>
    %cst_127 = arith.constant dense<0xFF800000> : vector<1xf32>
    %242 = vector.multi_reduction <maximumf>, %241, %cst_127 [1, 2] : vector<1x16x1xf32> to vector<1xf32>
    %243 = vector.shape_cast %242 : vector<1xf32> to vector<1x1x1xf32>
    %244 = vector.extract %243[0, 0, 0] : f32 from vector<1x1x1xf32>
    %245 = vector.broadcast %244 : f32 to vector<16x1xf32>
    %246 = arith.cmpf oeq, %231, %245 : vector<16x1xf32>
    %cst_128 = arith.constant 1.600000e+01 : f32
    %247 = vector.broadcast %cst_128 : f32 to vector<16x1xf32>
    %248 = arith.select %246, %5, %247 : vector<16x1xi1>, vector<16x1xf32>
    %249 = vector.shape_cast %248 : vector<16x1xf32> to vector<1x16x1xf32>
    %cst_129 = arith.constant dense<0x7F800000> : vector<1xf32>
    %250 = vector.multi_reduction <minimumf>, %249, %cst_129 [1, 2] : vector<1x16x1xf32> to vector<1xf32>
    %251 = vector.shape_cast %250 : vector<1xf32> to vector<1x1x1xf32>
    %252 = vector.extract %251[0, 0, 0] : f32 from vector<1x1x1xf32>
    %253 = vector.broadcast %252 : f32 to vector<16x1xf32>
    %254 = arith.cmpf oeq, %5, %253 : vector<16x1xf32>
    %cst_130 = arith.constant 0.000000e+00 : f32
    %255 = vector.broadcast %cst_130 : f32 to vector<16x1xf32>
    %256 = arith.select %254, %238, %255 : vector<16x1xi1>, vector<16x1xf32>
    %257 = vector.shape_cast %256 : vector<16x1xf32> to vector<1x16x1xf32>
    %cst_131 = arith.constant dense<0.000000e+00> : vector<1xf32>
    %258 = vector.multi_reduction <add>, %257, %cst_131 [1, 2] : vector<1x16x1xf32> to vector<1xf32>
    %259 = vector.shape_cast %258 : vector<1xf32> to vector<1x1x1xf32>
    %260 = vector.extract %259[0, 0, 0] : f32 from vector<1x1x1xf32>
    %261 = vector.broadcast %252 : f32 to vector<16x16xf32>
    %262 = arith.addf %1, %261 : vector<16x16xf32>
    %cst_132 = arith.constant 1.600000e+01 : f32
    %263 = vector.broadcast %cst_132 : f32 to vector<16x16xf32>
    %264 = arith.cmpf oge, %262, %263 : vector<16x16xf32>
    %cst_133 = arith.constant 1.600000e+01 : f32
    %265 = vector.broadcast %cst_133 : f32 to vector<16x16xf32>
    %266 = arith.subf %262, %265 : vector<16x16xf32>
    %267 = arith.select %264, %266, %262 : vector<16x16xi1>, vector<16x16xf32>
    %268 = arith.cmpf oeq, %267, %3 : vector<16x16xf32>
    %269 = arith.extui %268 : vector<16x16xi1> to vector<16x16xi32>
    %270 = arith.sitofp %269 : vector<16x16xi32> to vector<16x16xf32>
    %271 = vector.broadcast %260 : f32 to vector<16x16xf32>
    %272 = arith.mulf %271, %270 : vector<16x16xf32>
    %273 = arith.addf %239, %272 : vector<16x16xf32>
    %274 = vector.broadcast %260 : f32 to vector<1x1xf32>
    %275 = arith.addf %240, %274 : vector<1x1xf32>
    %276 = vector.broadcast %252 : f32 to vector<16x1xf32>
    %277 = arith.cmpf oeq, %5, %276 : vector<16x1xf32>
    %cst_134 = arith.constant -1.000000e+30 : f32
    %278 = vector.broadcast %cst_134 : f32 to vector<16x1xf32>
    %279 = arith.select %277, %278, %231 : vector<16x1xi1>, vector<16x1xf32>
    %280 = vector.shape_cast %279 : vector<16x1xf32> to vector<1x16x1xf32>
    %cst_135 = arith.constant dense<0xFF800000> : vector<1xf32>
    %281 = vector.multi_reduction <maximumf>, %280, %cst_135 [1, 2] : vector<1x16x1xf32> to vector<1xf32>
    %282 = vector.shape_cast %281 : vector<1xf32> to vector<1x1x1xf32>
    %283 = vector.extract %282[0, 0, 0] : f32 from vector<1x1x1xf32>
    %284 = vector.broadcast %283 : f32 to vector<16x1xf32>
    %285 = arith.cmpf oeq, %279, %284 : vector<16x1xf32>
    %cst_136 = arith.constant 1.600000e+01 : f32
    %286 = vector.broadcast %cst_136 : f32 to vector<16x1xf32>
    %287 = arith.select %285, %5, %286 : vector<16x1xi1>, vector<16x1xf32>
    %288 = vector.shape_cast %287 : vector<16x1xf32> to vector<1x16x1xf32>
    %cst_137 = arith.constant dense<0x7F800000> : vector<1xf32>
    %289 = vector.multi_reduction <minimumf>, %288, %cst_137 [1, 2] : vector<1x16x1xf32> to vector<1xf32>
    %290 = vector.shape_cast %289 : vector<1xf32> to vector<1x1x1xf32>
    %291 = vector.extract %290[0, 0, 0] : f32 from vector<1x1x1xf32>
    %292 = vector.broadcast %291 : f32 to vector<16x1xf32>
    %293 = arith.cmpf oeq, %5, %292 : vector<16x1xf32>
    %cst_138 = arith.constant 0.000000e+00 : f32
    %294 = vector.broadcast %cst_138 : f32 to vector<16x1xf32>
    %295 = arith.select %293, %238, %294 : vector<16x1xi1>, vector<16x1xf32>
    %296 = vector.shape_cast %295 : vector<16x1xf32> to vector<1x16x1xf32>
    %cst_139 = arith.constant dense<0.000000e+00> : vector<1xf32>
    %297 = vector.multi_reduction <add>, %296, %cst_139 [1, 2] : vector<1x16x1xf32> to vector<1xf32>
    %298 = vector.shape_cast %297 : vector<1xf32> to vector<1x1x1xf32>
    %299 = vector.extract %298[0, 0, 0] : f32 from vector<1x1x1xf32>
    %300 = vector.broadcast %291 : f32 to vector<16x16xf32>
    %301 = arith.addf %1, %300 : vector<16x16xf32>
    %cst_140 = arith.constant 1.600000e+01 : f32
    %302 = vector.broadcast %cst_140 : f32 to vector<16x16xf32>
    %303 = arith.cmpf oge, %301, %302 : vector<16x16xf32>
    %cst_141 = arith.constant 1.600000e+01 : f32
    %304 = vector.broadcast %cst_141 : f32 to vector<16x16xf32>
    %305 = arith.subf %301, %304 : vector<16x16xf32>
    %306 = arith.select %303, %305, %301 : vector<16x16xi1>, vector<16x16xf32>
    %307 = arith.cmpf oeq, %306, %3 : vector<16x16xf32>
    %308 = arith.extui %307 : vector<16x16xi1> to vector<16x16xi32>
    %309 = arith.sitofp %308 : vector<16x16xi32> to vector<16x16xf32>
    %310 = vector.broadcast %299 : f32 to vector<16x16xf32>
    %311 = arith.mulf %310, %309 : vector<16x16xf32>
    %312 = arith.addf %273, %311 : vector<16x16xf32>
    %313 = vector.broadcast %299 : f32 to vector<1x1xf32>
    %314 = arith.addf %275, %313 : vector<1x1xf32>
    %315 = tpu.reciprocal %314 {approx = true} : vector<1x1xf32> -> vector<1x1xf32>
    %316 = vector.broadcast %315 : vector<1x1xf32> to vector<16x16xf32>
    %317 = arith.mulf %312, %316 : vector<16x16xf32>
    %318 = arith.truncf %317 : vector<16x16xf32> to vector<16x16xbf16>
    %319 = arith.truncf %193 : vector<16x32xf32> to vector<16x32xbf16>
    %cst_142 = arith.constant dense<0.000000e+00> : vector<16x32xf32>
    %320 = tpu.matmul %318, %319, %cst_142 {dimension_numbers = #tpu.dot_dimension_numbers<[1], [0], [0], [1], [0, 0, 1, 1], [], []>} : vector<16x16xbf16>, vector<16x32xbf16>, vector<16x32xf32> -> vector<16x32xf32>
    %321 = arith.truncf %320 : vector<16x32xf32> to vector<16x32xbf16>
    %cst_143 = arith.constant dense<0.000000e+00> : vector<16x32xf32>
    %322 = tpu.matmul %321, %182, %cst_143 {dimension_numbers = #tpu.dot_dimension_numbers<[1], [0], [0], [1], [0, 0, 1, 1], [], []>} : vector<16x32xbf16>, vector<32x32xbf16>, vector<16x32xf32> -> vector<16x32xf32>
    %323 = vector.broadcast %186 : vector<1x32xf32> to vector<16x32xf32>
    %324 = arith.addf %322, %323 : vector<16x32xf32>
    %325 = arith.addf %178, %324 : vector<16x32xf32>
    %326 = arith.truncf %325 : vector<16x32xf32> to vector<16x32xbf16>
    %cst_144 = arith.constant dense<0.000000e+00> : vector<16x32xf32>
    %327 = tpu.matmul %6, %326, %cst_144 {dimension_numbers = #tpu.dot_dimension_numbers<[1], [0], [0], [1], [0, 0, 1, 1], [], []>} : vector<16x16xbf16>, vector<16x32xbf16>, vector<16x32xf32> -> vector<16x32xf32>
    %328 = arith.subf %325, %327 : vector<16x32xf32>
    %c1_145 = arith.constant 1 : index
    %c0_146 = arith.constant 0 : index
    %c0_147 = arith.constant 0 : index
    %329 = vector.load %arg8[%c1_145, %c0_146, %c0_147] : memref<2x32x64xbf16, #tpu.memory_space<vmem>>, vector<1x32x64xbf16>
    %330 = vector.shape_cast %329 : vector<1x32x64xbf16> to vector<32x64xbf16>
    %331 = arith.truncf %328 : vector<16x32xf32> to vector<16x32xbf16>
    %cst_148 = arith.constant dense<0.000000e+00> : vector<16x64xf32>
    %332 = tpu.matmul %331, %330, %cst_148 {dimension_numbers = #tpu.dot_dimension_numbers<[1], [0], [0], [1], [0, 0, 1, 1], [], []>} : vector<16x32xbf16>, vector<32x64xbf16>, vector<16x64xf32> -> vector<16x64xf32>
    %cst_149 = arith.constant 0.000000e+00 : f32
    %333 = vector.broadcast %cst_149 : f32 to vector<16x64xf32>
    %334 = arith.maximumf %332, %333 : vector<16x64xf32>
    %c1_150 = arith.constant 1 : index
    %c0_151 = arith.constant 0 : index
    %c0_152 = arith.constant 0 : index
    %335 = vector.load %arg9[%c1_150, %c0_151, %c0_152] : memref<2x64x32xbf16, #tpu.memory_space<vmem>>, vector<1x64x32xbf16>
    %336 = vector.shape_cast %335 : vector<1x64x32xbf16> to vector<64x32xbf16>
    %337 = arith.truncf %334 : vector<16x64xf32> to vector<16x64xbf16>
    %cst_153 = arith.constant dense<0.000000e+00> : vector<16x32xf32>
    %338 = tpu.matmul %337, %336, %cst_153 {dimension_numbers = #tpu.dot_dimension_numbers<[1], [0], [0], [1], [0, 0, 1, 1], [], []>} : vector<16x64xbf16>, vector<64x32xbf16>, vector<16x32xf32> -> vector<16x32xf32>
    %339 = arith.addf %328, %338 : vector<16x32xf32>
    %340 = arith.truncf %339 : vector<16x32xf32> to vector<16x32xbf16>
    %cst_154 = arith.constant dense<0.000000e+00> : vector<16x32xf32>
    %341 = tpu.matmul %6, %340, %cst_154 {dimension_numbers = #tpu.dot_dimension_numbers<[1], [0], [0], [1], [0, 0, 1, 1], [], []>} : vector<16x16xbf16>, vector<16x32xbf16>, vector<16x32xf32> -> vector<16x32xf32>
    %342 = arith.subf %339, %341 : vector<16x32xf32>
    %cst_155 = arith.constant dense<0.000000e+00> : vector<16xf32>
    %343 = vector.multi_reduction <add>, %342, %cst_155 [1] : vector<16x32xf32> to vector<16xf32>
    %344 = vector.shape_cast %343 : vector<16xf32> to vector<16x1xf32>
    %cst_156 = arith.constant 3.200000e+01 : f32
    %345 = vector.broadcast %cst_156 : f32 to vector<16x1xf32>
    %346 = arith.divf %344, %345 : vector<16x1xf32>
    %347 = vector.broadcast %346 : vector<16x1xf32> to vector<16x32xf32>
    %348 = arith.subf %342, %347 : vector<16x32xf32>
    %349 = arith.mulf %348, %348 : vector<16x32xf32>
    %cst_157 = arith.constant dense<0.000000e+00> : vector<16xf32>
    %350 = vector.multi_reduction <add>, %349, %cst_157 [1] : vector<16x32xf32> to vector<16xf32>
    %351 = vector.shape_cast %350 : vector<16xf32> to vector<16x1xf32>
    %cst_158 = arith.constant 3.200000e+01 : f32
    %352 = vector.broadcast %cst_158 : f32 to vector<16x1xf32>
    %353 = arith.divf %351, %352 : vector<16x1xf32>
    %c0_159 = arith.constant 0 : index
    %c0_160 = arith.constant 0 : index
    %354 = vector.load %arg10[%c0_159, %c0_160] : memref<2x32xf32, #tpu.memory_space<vmem>>, vector<1x32xf32>
    %c1_161 = arith.constant 1 : index
    %c0_162 = arith.constant 0 : index
    %355 = vector.load %arg10[%c1_161, %c0_162] : memref<2x32xf32, #tpu.memory_space<vmem>>, vector<1x32xf32>
    %356 = vector.broadcast %346 : vector<16x1xf32> to vector<16x32xf32>
    %357 = arith.subf %342, %356 : vector<16x32xf32>
    %cst_163 = arith.constant 9.99999974E-6 : f32
    %358 = vector.broadcast %cst_163 : f32 to vector<16x1xf32>
    %359 = arith.addf %353, %358 : vector<16x1xf32>
    %360 = math.rsqrt %359 : vector<16x1xf32>
    %361 = vector.broadcast %360 : vector<16x1xf32> to vector<16x32xf32>
    %362 = arith.mulf %357, %361 : vector<16x32xf32>
    %363 = vector.broadcast %354 : vector<1x32xf32> to vector<16x32xf32>
    %364 = arith.mulf %362, %363 : vector<16x32xf32>
    %365 = vector.broadcast %355 : vector<1x32xf32> to vector<16x32xf32>
    %366 = arith.addf %364, %365 : vector<16x32xf32>
    %cst_164 = arith.constant dense<0.000000e+00> : vector<32xf32>
    %367 = vector.multi_reduction <add>, %366, %cst_164 [0] : vector<16x32xf32> to vector<32xf32>
    %368 = vector.shape_cast %367 : vector<32xf32> to vector<1x32xf32>
    %cst_165 = arith.constant 1.600000e+01 : f32
    %369 = vector.broadcast %cst_165 : f32 to vector<1x32xf32>
    %370 = arith.divf %368, %369 : vector<1x32xf32>
    %371 = vector.broadcast %370 : vector<1x32xf32> to vector<16x32xf32>
    %372 = arith.subf %366, %371 : vector<16x32xf32>
    %c0_166 = arith.constant 0 : index
    %c0_167 = arith.constant 0 : index
    %373 = vector.load %arg12[%c0_166, %c0_167] : memref<32x128xbf16, #tpu.memory_space<vmem>>, vector<32x128xbf16>
    %374 = arith.truncf %372 : vector<16x32xf32> to vector<16x32xbf16>
    %cst_168 = arith.constant dense<0.000000e+00> : vector<16x128xf32>
    %375 = tpu.matmul %374, %373, %cst_168 {dimension_numbers = #tpu.dot_dimension_numbers<[1], [0], [0], [1], [0, 0, 1, 1], [], []>} : vector<16x32xbf16>, vector<32x128xbf16>, vector<16x128xf32> -> vector<16x128xf32>
    %c0_169 = arith.constant 0 : index
    %c0_170 = arith.constant 0 : index
    %376 = vector.load %arg13[%c0_169, %c0_170] : memref<1x128xf32, #tpu.memory_space<vmem>>, vector<1x128xf32>
    %377 = vector.broadcast %376 : vector<1x128xf32> to vector<16x128xf32>
    %378 = arith.addf %375, %377 : vector<16x128xf32>
    %c0_171 = arith.constant 0 : index
    %c0_172 = arith.constant 0 : index
    %c0_173 = arith.constant 0 : index
    %379 = vector.load %arg3[%c0_171, %c0_172, %c0_173] : memref<1x16x128xf32, #tpu.memory_space<vmem>>, vector<1x16x128xf32>
    %380 = vector.shape_cast %379 : vector<1x16x128xf32> to vector<16x128xf32>
    %c0_174 = arith.constant 0 : index
    %c0_175 = arith.constant 0 : index
    %c0_176 = arith.constant 0 : index
    %381 = vector.load %arg2[%c0_174, %c0_175, %c0_176] : memref<1x16x128xf32, #tpu.memory_space<vmem>>, vector<1x16x128xf32>
    %382 = vector.shape_cast %381 : vector<1x16x128xf32> to vector<16x128xf32>
    %383 = arith.mulf %380, %382 : vector<16x128xf32>
    %cst_177 = arith.constant 1.000000e+00 : f32
    %384 = vector.broadcast %cst_177 : f32 to vector<16x128xf32>
    %385 = arith.subf %384, %380 : vector<16x128xf32>
    %386 = arith.mulf %385, %378 : vector<16x128xf32>
    %387 = arith.addf %383, %386 : vector<16x128xf32>
    %c0_178 = arith.constant 0 : index
    %c0_179 = arith.constant 0 : index
    %c0_180 = arith.constant 0 : index
    %388 = vector.load %arg14[%c0_178, %c0_179, %c0_180] : memref<1x16x128xf32, #tpu.memory_space<vmem>>, vector<1x16x128xf32>
    %389 = vector.shape_cast %388 : vector<1x16x128xf32> to vector<16x128xf32>
    %390 = vector.shape_cast %387 : vector<16x128xf32> to vector<1x16x128xf32>
    tpu.vector_store %arg14[%c0_178, %c0_179, %c0_180], %390 {strides = array<i32>} : memref<1x16x128xf32, #tpu.memory_space<vmem>>, vector<1x16x128xf32>,
    return
  }
  func.func @transform_0(%arg0: i32) -> (i32, i32, i32) {
    %c0_i32 = arith.constant 0 : i32
    %c0_i32_0 = arith.constant 0 : i32
    %c0_i32_1 = arith.constant 0 : i32
    return %arg0, %c0_i32, %c0_i32_0 : i32, i32, i32
  }
  func.func @transform_1(%arg0: i32) -> (i32, i32, i32) {
    %c0_i32 = arith.constant 0 : i32
    %c0_i32_0 = arith.constant 0 : i32
    %c0_i32_1 = arith.constant 0 : i32
    return %arg0, %c0_i32, %c0_i32_0 : i32, i32, i32
  }
  func.func @transform_2(%arg0: i32) -> (i32, i32, i32) {
    %c0_i32 = arith.constant 0 : i32
    %c0_i32_0 = arith.constant 0 : i32
    %c0_i32_1 = arith.constant 0 : i32
    return %arg0, %c0_i32, %c0_i32_0 : i32, i32, i32
  }
  func.func @transform_3(%arg0: i32) -> (i32, i32) {
    %c0_i32 = arith.constant 0 : i32
    %c0_i32_0 = arith.constant 0 : i32
    %c0_i32_1 = arith.constant 0 : i32
    return %c0_i32, %c0_i32_0 : i32, i32
  }
  func.func @transform_4(%arg0: i32) -> (i32, i32) {
    %c0_i32 = arith.constant 0 : i32
    %c0_i32_0 = arith.constant 0 : i32
    %c0_i32_1 = arith.constant 0 : i32
    return %c0_i32, %c0_i32_0 : i32, i32
  }
  func.func @transform_5(%arg0: i32) -> (i32, i32, i32) {
    %c0_i32 = arith.constant 0 : i32
    %c0_i32_0 = arith.constant 0 : i32
    %c0_i32_1 = arith.constant 0 : i32
    %c0_i32_2 = arith.constant 0 : i32
    return %c0_i32, %c0_i32_0, %c0_i32_1 : i32, i32, i32
  }
  func.func @transform_6(%arg0: i32) -> (i32, i32, i32) {
    %c0_i32 = arith.constant 0 : i32
    %c0_i32_0 = arith.constant 0 : i32
    %c0_i32_1 = arith.constant 0 : i32
    %c0_i32_2 = arith.constant 0 : i32
    return %c0_i32, %c0_i32_0, %c0_i32_1 : i32, i32, i32
  }
  func.func @transform_7(%arg0: i32) -> (i32, i32, i32) {
    %c0_i32 = arith.constant 0 : i32
    %c0_i32_0 = arith.constant 0 : i32
    %c0_i32_1 = arith.constant 0 : i32
    %c0_i32_2 = arith.constant 0 : i32
    return %c0_i32, %c0_i32_0, %c0_i32_1 : i32, i32, i32
  }
  func.func @transform_8(%arg0: i32) -> (i32, i32, i32) {
    %c0_i32 = arith.constant 0 : i32
    %c0_i32_0 = arith.constant 0 : i32
    %c0_i32_1 = arith.constant 0 : i32
    %c0_i32_2 = arith.constant 0 : i32
    return %c0_i32, %c0_i32_0, %c0_i32_1 : i32, i32, i32
  }
  func.func @transform_9(%arg0: i32) -> (i32, i32) {
    %c0_i32 = arith.constant 0 : i32
    %c0_i32_0 = arith.constant 0 : i32
    %c0_i32_1 = arith.constant 0 : i32
    return %c0_i32, %c0_i32_0 : i32, i32
  }
  func.func @transform_10(%arg0: i32) -> (i32, i32) {
    %c0_i32 = arith.constant 0 : i32
    %c0_i32_0 = arith.constant 0 : i32
    %c0_i32_1 = arith.constant 0 : i32
    return %c0_i32, %c0_i32_0 : i32, i32
  }
  func.func @transform_11(%arg0: i32) -> (i32, i32) {
    %c0_i32 = arith.constant 0 : i32
    %c0_i32_0 = arith.constant 0 : i32
    %c0_i32_1 = arith.constant 0 : i32
    return %c0_i32, %c0_i32_0 : i32, i32
  }
  func.func @transform_12(%arg0: i32) -> (i32, i32) {
    %c0_i32 = arith.constant 0 : i32
    %c0_i32_0 = arith.constant 0 : i32
    %c0_i32_1 = arith.constant 0 : i32
    return %c0_i32, %c0_i32_0 : i32, i32
  }
  func.func @transform_13(%arg0: i32) -> (i32, i32, i32) {
    %c0_i32 = arith.constant 0 : i32
    %c0_i32_0 = arith.constant 0 : i32
    %c0_i32_1 = arith.constant 0 : i32
    return %arg0, %c0_i32, %c0_i32_0 : i32, i32, i32
  }
}

</mosaic_0001>

<llo_original>
// kernel: autoformer_forward.1
$region0: #{autoformer_forward.1}
  #allocation0 [shape = 'u32[]', space=smem, size = 0x4, offset = 0x4, fixed_abs, tag = 'smem constant byte address 0x4 - core index']
  #allocation1 [shape = 'u32[72,128]{1,0:T(1,128)}', space=vmem, size = 0x9000, scoped, tag = 'internal scratch']
  #allocation2 [shape = 'f32[32,16]{1,0:T(8,128)}', space=vmem, size = 0x4000, scoped, tag = 'scratch operand']
  %s0 = inlined_call_operand.vmem [shape: f32[2,16,8], index: 0, kind: input, shape index: {}]
  %s1 = inlined_call_operand.vmem [shape: f32[2,16,128], index: 1, kind: input, shape index: {}]
  %s2 = inlined_call_operand.vmem [shape: f32[2,16,128], index: 2, kind: input, shape index: {}]
  %s3 = inlined_call_operand.vmem [shape: bf16[8,32], index: 3, kind: input, shape index: {}]
  %s4 = inlined_call_operand.vmem [shape: f32[1,32], index: 4, kind: input, shape index: {}]
  %s5 = inlined_call_operand.vmem [shape: bf16[2,32,128], index: 5, kind: input, shape index: {}]
  %s6 = inlined_call_operand.vmem [shape: f32[2,1,128], index: 6, kind: input, shape index: {}]
  %s7 = inlined_call_operand.vmem [shape: bf16[2,32,64], index: 7, kind: input, shape index: {}]
  %s8 = inlined_call_operand.vmem [shape: bf16[2,64,32], index: 8, kind: input, shape index: {}]
  %s9 = inlined_call_operand.vmem [shape: f32[2,32], index: 9, kind: input, shape index: {}]
  %s10 = inlined_call_operand.vmem [shape: bf16[16,16], index: 10, kind: input, shape index: {}]
  %s11 = inlined_call_operand.vmem [shape: bf16[32,128], index: 11, kind: input, shape index: {}]
  %s12 = inlined_call_operand.vmem [shape: f32[1,128], index: 12, kind: input, shape index: {}]
  %s13 = inlined_call_operand.vmem [shape: f32[2,16,128], index: 13, kind: output, shape index: {}]
  %s14 = sld [smem:[#allocation0]]
  $region85: #{autoformer_forward.1} parent=0
    _
  %s16 = ssub.s32 1, %s14
  %s17 = scalar_select 0, %s16, %s14
  loop: start=0, step=1, limit=4
  $region2: #{autoformer_forward.1} parent=0 // loop_pre_header
    _
  $region3: #{autoformer_forward.1} parent=0 // loop_header
    %s19 = sphi 0, %s23
    %p20 = scmp.ge.s32.totalorder %s19, 4
    %s29 = sphi 0, %s31
    %s32 = sphi 0, %s29
    %s33 = sphi 0, %s32
    %s49 = sphi 0, %s33
    %s55 = sphi 0, %s57
    %s58 = sphi 0, %s55
    %s59 = sphi 0, %s58
    %s75 = sphi 0, %s59
    %s81 = sphi 0, %s83
    %s84 = sphi 0, %s81
    %s85 = sphi 0, %s84
    %s101 = sphi 0, %s85
    %s105 = sphi 0, %s105
    %s107 = sphi 0, %s105
    %s108 = sphi 0, %s107
    %s122 = sphi 0, %s108
    %s126 = sphi 0, %s126
    %s128 = sphi 0, %s126
    %s129 = sphi 0, %s128
    %s143 = sphi 0, %s129
    %s147 = sphi 0, %s147
    %s149 = sphi 0, %s147
    %s150 = sphi 0, %s149
    %s164 = sphi 0, %s150
    %s168 = sphi 0, %s168
    %s170 = sphi 0, %s168
    %s171 = sphi 0, %s170
    %s185 = sphi 0, %s171
    %s189 = sphi 0, %s189
    %s191 = sphi 0, %s189
    %s192 = sphi 0, %s191
    %s206 = sphi 0, %s192
    %s210 = sphi 0, %s210
    %s212 = sphi 0, %s210
    %s213 = sphi 0, %s212
    %s227 = sphi 0, %s213
    %s231 = sphi 0, %s231
    %s233 = sphi 0, %s231
    %s234 = sphi 0, %s233
    %s248 = sphi 0, %s234
    %s252 = sphi 0, %s252
    %s254 = sphi 0, %s252
    %s255 = sphi 0, %s254
    %s269 = sphi 0, %s255
    %s273 = sphi 0, %s273
    %s275 = sphi 0, %s273
    %s276 = sphi 0, %s275
    %s290 = sphi 0, %s276
    %s294 = sphi 0, %s294
    %s296 = sphi 0, %s294
    %s297 = sphi 0, %s296
    %s311 = sphi 0, %s297
    %s317 = sphi 0, %s319
    %s320 = sphi 0, %s317
    %s321 = sphi 0, %s320
    %s337 = sphi 0, %s321
  $region4: #{autoformer_forward.1} parent=0 // loop_header_branch
    %22 = sbr.rel (%p20) target = $region8
  $region5: #{autoformer_forward.1} parent=0 // loop_body
    %s24 = ssub.s32 %s19, 1
    %s25 = ssub.s32 %s19, 2
    %s26 = sadd.s32 %s19, 1
    %s27 = ssub.s32 %s19, %s26
    %p28 = scmp.eq.s32.totalorder %s27, 0
    %s30 = sadd.s32 %s29, 1
    %s31 = scalar_select %p28, %s29, %s30
    %p34 = pneg %p28
    %p35 = scmp.eq.s32.totalorder %s19, 1
    %p36 = por %p34, %p35
    %p37 = scmp.ne.s32.totalorder %s29, %s32
    %p38 = scmp.eq.s32.totalorder %s19, 0
    %p39 = por %p37, %p38
    %p40 = scmp.ne.s32.totalorder %s29, %s32
    %p41 = scmp.eq.s32.totalorder %s24, 1
    %p42 = por %p40, %p41
    %p43 = scmp.ne.s32.totalorder %s32, %s33
    %p44 = scmp.eq.s32.totalorder %s24, 0
    %p45 = por %p43, %p44
    %p46 = scmp.ne.s32.totalorder %s32, %s33
    %p47 = scmp.eq.s32.totalorder %s25, 1
    %p48 = por %p46, %p47
    %p50 = scmp.ne.s32.totalorder %s33, %s49
    %p51 = scmp.eq.s32.totalorder %s25, 0
    %p52 = por %p50, %p51
    %s53 = ssub.s32 %s19, %s26
    %p54 = scmp.eq.s32.totalorder %s53, 0
    %s56 = sadd.s32 %s55, 1
    %s57 = scalar_select %p54, %s55, %s56
    %p60 = pneg %p54
    %p61 = scmp.eq.s32.totalorder %s19, 1
    %p62 = por %p60, %p61
    %p63 = scmp.ne.s32.totalorder %s55, %s58
    %p64 = scmp.eq.s32.totalorder %s19, 0
    %p65 = por %p63, %p64
    %p66 = scmp.ne.s32.totalorder %s55, %s58
    %p67 = scmp.eq.s32.totalorder %s24, 1
    %p68 = por %p66, %p67
    %p69 = scmp.ne.s32.totalorder %s58, %s59
    %p70 = scmp.eq.s32.totalorder %s24, 0
    %p71 = por %p69, %p70
    %p72 = scmp.ne.s32.totalorder %s58, %s59
    %p73 = scmp.eq.s32.totalorder %s25, 1
    %p74 = por %p72, %p73
    %p76 = scmp.ne.s32.totalorder %s59, %s75
    %p77 = scmp.eq.s32.totalorder %s25, 0
    %p78 = por %p76, %p77
    %s79 = ssub.s32 %s19, %s26
    %p80 = scmp.eq.s32.totalorder %s79, 0
    %s82 = sadd.s32 %s81, 1
    %s83 = scalar_select %p80, %s81, %s82
    %p86 = pneg %p80
    %p87 = scmp.eq.s32.totalorder %s19, 1
    %p88 = por %p86, %p87
    %p89 = scmp.ne.s32.totalorder %s81, %s84
    %p90 = scmp.eq.s32.totalorder %s19, 0
    %p91 = por %p89, %p90
    %p92 = scmp.ne.s32.totalorder %s81, %s84
    %p93 = scmp.eq.s32.totalorder %s24, 1
    %p94 = por %p92, %p93
    %p95 = scmp.ne.s32.totalorder %s84, %s85
    %p96 = scmp.eq.s32.totalorder %s24, 0
    %p97 = por %p95, %p96
    %p98 = scmp.ne.s32.totalorder %s84, %s85
    %p99 = scmp.eq.s32.totalorder %s25, 1
    %p100 = por %p98, %p99
    %p102 = scmp.ne.s32.totalorder %s85, %s101
    %p103 = scmp.eq.s32.totalorder %s25, 0
    %p104 = por %p102, %p103
    %s106 = sadd.s32 %s105, 1
    %p109 = scmp.eq.s32.totalorder %s19, 1
    %p110 = scmp.ne.s32.totalorder %s105, %s107
    %p111 = scmp.eq.s32.totalorder %s19, 0
    %p112 = por %p110, %p111
    %p113 = scmp.ne.s32.totalorder %s105, %s107
    %p114 = scmp.eq.s32.totalorder %s24, 1
    %p115 = por %p113, %p114
    %p116 = scmp.ne.s32.totalorder %s107, %s108
    %p117 = scmp.eq.s32.totalorder %s24, 0
    %p118 = por %p116, %p117
    %p119 = scmp.ne.s32.totalorder %s107, %s108
    %p120 = scmp.eq.s32.totalorder %s25, 1
    %p121 = por %p119, %p120
    %p123 = scmp.ne.s32.totalorder %s108, %s122
    %p124 = scmp.eq.s32.totalorder %s25, 0
    %p125 = por %p123, %p124
    %s127 = sadd.s32 %s126, 1
    %p130 = scmp.eq.s32.totalorder %s19, 1
    %p131 = scmp.ne.s32.totalorder %s126, %s128
    %p132 = scmp.eq.s32.totalorder %s19, 0
    %p133 = por %p131, %p132
    %p134 = scmp.ne.s32.totalorder %s126, %s128
    %p135 = scmp.eq.s32.totalorder %s24, 1
    %p136 = por %p134, %p135
    %p137 = scmp.ne.s32.totalorder %s128, %s129
    %p138 = scmp.eq.s32.totalorder %s24, 0
    %p139 = por %p137, %p138
    %p140 = scmp.ne.s32.totalorder %s128, %s129
    %p141 = scmp.eq.s32.totalorder %s25, 1
    %p142 = por %p140, %p141
    %p144 = scmp.ne.s32.totalorder %s129, %s143
    %p145 = scmp.eq.s32.totalorder %s25, 0
    %p146 = por %p144, %p145
    %s148 = sadd.s32 %s147, 1
    %p151 = scmp.eq.s32.totalorder %s19, 1
    %p152 = scmp.ne.s32.totalorder %s147, %s149
    %p153 = scmp.eq.s32.totalorder %s19, 0
    %p154 = por %p152, %p153
    %p155 = scmp.ne.s32.totalorder %s147, %s149
    %p156 = scmp.eq.s32.totalorder %s24, 1
    %p157 = por %p155, %p156
    %p158 = scmp.ne.s32.totalorder %s149, %s150
    %p159 = scmp.eq.s32.totalorder %s24, 0
    %p160 = por %p158, %p159
    %p161 = scmp.ne.s32.totalorder %s149, %s150
    %p162 = scmp.eq.s32.totalorder %s25, 1
    %p163 = por %p161, %p162
    %p165 = scmp.ne.s32.totalorder %s150, %s164
    %p166 = scmp.eq.s32.totalorder %s25, 0
    %p167 = por %p165, %p166
    %s169 = sadd.s32 %s168, 1
    %p172 = scmp.eq.s32.totalorder %s19, 1
    %p173 = scmp.ne.s32.totalorder %s168, %s170
    %p174 = scmp.eq.s32.totalorder %s19, 0
    %p175 = por %p173, %p174
    %p176 = scmp.ne.s32.totalorder %s168, %s170
    %p177 = scmp.eq.s32.totalorder %s24, 1
    %p178 = por %p176, %p177
    %p179 = scmp.ne.s32.totalorder %s170, %s171
    %p180 = scmp.eq.s32.totalorder %s24, 0
    %p181 = por %p179, %p180
    %p182 = scmp.ne.s32.totalorder %s170, %s171
    %p183 = scmp.eq.s32.totalorder %s25, 1
    %p184 = por %p182, %p183
    %p186 = scmp.ne.s32.totalorder %s171, %s185
    %p187 = scmp.eq.s32.totalorder %s25, 0
    %p188 = por %p186, %p187
    %s190 = sadd.s32 %s189, 1
    %p193 = scmp.eq.s32.totalorder %s19, 1
    %p194 = scmp.ne.s32.totalorder %s189, %s191
    %p195 = scmp.eq.s32.totalorder %s19, 0
    %p196 = por %p194, %p195
    %p197 = scmp.ne.s32.totalorder %s189, %s191
    %p198 = scmp.eq.s32.totalorder %s24, 1
    %p199 = por %p197, %p198
    %p200 = scmp.ne.s32.totalorder %s191, %s192
    %p201 = scmp.eq.s32.totalorder %s24, 0
    %p202 = por %p200, %p201
    %p203 = scmp.ne.s32.totalorder %s191, %s192
    %p204 = scmp.eq.s32.totalorder %s25, 1
    %p205 = por %p203, %p204
    %p207 = scmp.ne.s32.totalorder %s192, %s206
    %p208 = scmp.eq.s32.totalorder %s25, 0
    %p209 = por %p207, %p208
    %s211 = sadd.s32 %s210, 1
    %p214 = scmp.eq.s32.totalorder %s19, 1
    %p215 = scmp.ne.s32.totalorder %s210, %s212
    %p216 = scmp.eq.s32.totalorder %s19, 0
    %p217 = por %p215, %p216
    %p218 = scmp.ne.s32.totalorder %s210, %s212
    %p219 = scmp.eq.s32.totalorder %s24, 1
    %p220 = por %p218, %p219
    %p221 = scmp.ne.s32.totalorder %s212, %s213
    %p222 = scmp.eq.s32.totalorder %s24, 0
    %p223 = por %p221, %p222
    %p224 = scmp.ne.s32.totalorder %s212, %s213
    %p225 = scmp.eq.s32.totalorder %s25, 1
    %p226 = por %p224, %p225
    %p228 = scmp.ne.s32.totalorder %s213, %s227
    %p229 = scmp.eq.s32.totalorder %s25, 0
    %p230 = por %p228, %p229
    %s232 = sadd.s32 %s231, 1
    %p235 = scmp.eq.s32.totalorder %s19, 1
    %p236 = scmp.ne.s32.totalorder %s231, %s233
    %p237 = scmp.eq.s32.totalorder %s19, 0
    %p238 = por %p236, %p237
    %p239 = scmp.ne.s32.totalorder %s231, %s233
    %p240 = scmp.eq.s32.totalorder %s24, 1
    %p241 = por %p239, %p240
    %p242 = scmp.ne.s32.totalorder %s233, %s234
    %p243 = scmp.eq.s32.totalorder %s24, 0
    %p244 = por %p242, %p243
    %p245 = scmp.ne.s32.totalorder %s233, %s234
    %p246 = scmp.eq.s32.totalorder %s25, 1
    %p247 = por %p245, %p246
    %p249 = scmp.ne.s32.totalorder %s234, %s248
    %p250 = scmp.eq.s32.totalorder %s25, 0
    %p251 = por %p249, %p250
    %s253 = sadd.s32 %s252, 1
    %p256 = scmp.eq.s32.totalorder %s19, 1
    %p257 = scmp.ne.s32.totalorder %s252, %s254
    %p258 = scmp.eq.s32.totalorder %s19, 0
    %p259 = por %p257, %p258
    %p260 = scmp.ne.s32.totalorder %s252, %s254
    %p261 = scmp.eq.s32.totalorder %s24, 1
    %p262 = por %p260, %p261
    %p263 = scmp.ne.s32.totalorder %s254, %s255
    %p264 = scmp.eq.s32.totalorder %s24, 0
    %p265 = por %p263, %p264
    %p266 = scmp.ne.s32.totalorder %s254, %s255
    %p267 = scmp.eq.s32.totalorder %s25, 1
    %p268 = por %p266, %p267
    %p270 = scmp.ne.s32.totalorder %s255, %s269
    %p271 = scmp.eq.s32.totalorder %s25, 0
    %p272 = por %p270, %p271
    %s274 = sadd.s32 %s273, 1
    %p277 = scmp.eq.s32.totalorder %s19, 1
    %p278 = scmp.ne.s32.totalorder %s273, %s275
    %p279 = scmp.eq.s32.totalorder %s19, 0
    %p280 = por %p278, %p279
    %p281 = scmp.ne.s32.totalorder %s273, %s275
    %p282 = scmp.eq.s32.totalorder %s24, 1
    %p283 = por %p281, %p282
    %p284 = scmp.ne.s32.totalorder %s275, %s276
    %p285 = scmp.eq.s32.totalorder %s24, 0
    %p286 = por %p284, %p285
    %p287 = scmp.ne.s32.totalorder %s275, %s276
    %p288 = scmp.eq.s32.totalorder %s25, 1
    %p289 = por %p287, %p288
    %p291 = scmp.ne.s32.totalorder %s276, %s290
    %p292 = scmp.eq.s32.totalorder %s25, 0
    %p293 = por %p291, %p292
    %s295 = sadd.s32 %s294, 1
    %p298 = scmp.eq.s32.totalorder %s19, 1
    %p299 = scmp.ne.s32.totalorder %s294, %s296
    %p300 = scmp.eq.s32.totalorder %s19, 0
    %p301 = por %p299, %p300
    %p302 = scmp.ne.s32.totalorder %s294, %s296
    %p303 = scmp.eq.s32.totalorder %s24, 1
    %p304 = por %p302, %p303
    %p305 = scmp.ne.s32.totalorder %s296, %s297
    %p306 = scmp.eq.s32.totalorder %s24, 0
    %p307 = por %p305, %p306
    %p308 = scmp.ne.s32.totalorder %s296, %s297
    %p309 = scmp.eq.s32.totalorder %s25, 1
    %p310 = por %p308, %p309
    %p312 = scmp.ne.s32.totalorder %s297, %s311
    %p313 = scmp.eq.s32.totalorder %s25, 0
    %p314 = por %p312, %p313
    %s315 = ssub.s32 %s19, %s26
    %p316 = scmp.eq.s32.totalorder %s315, 0
    %s318 = sadd.s32 %s317, 1
    %s319 = scalar_select %p316, %s317, %s318
    %p322 = pneg %p316
    %p323 = scmp.eq.s32.totalorder %s19, 1
    %p324 = por %p322, %p323
    %p325 = scmp.ne.s32.totalorder %s317, %s320
    %p326 = scmp.eq.s32.totalorder %s19, 0
    %p327 = por %p325, %p326
    %p328 = scmp.ne.s32.totalorder %s317, %s320
    %p329 = scmp.eq.s32.totalorder %s24, 1
    %p330 = por %p328, %p329
    %p331 = scmp.ne.s32.totalorder %s320, %s321
    %p332 = scmp.eq.s32.totalorder %s24, 0
    %p333 = por %p331, %p332
    %p334 = scmp.ne.s32.totalorder %s320, %s321
    %p335 = scmp.eq.s32.totalorder %s25, 1
    %p336 = por %p334, %p335
    %p338 = scmp.ne.s32.totalorder %s321, %s337
    %p339 = scmp.eq.s32.totalorder %s25, 0
    %p340 = por %p338, %p339
    %p341 = scmp.le.s32.totalorder 1, %s19
    %p342 = scmp.lt.s32.totalorder %s19, 3
    %p343 = pnand %p341, %p342
    %p344 = pneg %p343
    // Predicated region
    $region9: #{autoformer_forward.1} parent=5 // pred_check
      _
    $region10: #{autoformer_forward.1} parent=5 // pred_check_branch
      %346 = sbr.rel (%p343) target = $region12
    $region11: #{autoformer_forward.1} parent=5 // pred_region
      %s347 = ssub.s32 %s19, 1
      // Predicated region
      $region13: #{autoformer_forward.1} parent=11 // pred_check
        %p348 = pneg %p118
      $region14: #{autoformer_forward.1} parent=11 // pred_check_branch
        %350 = sbr.rel (%p348) target = $region16
      $region15: #{autoformer_forward.1} parent=11 // pred_region
        _
      $region16: #{autoformer_forward.1} parent=11 // pred_fallthru
        _
      // Predicated region
      $region17: #{autoformer_forward.1} parent=11 // pred_check
        %p351 = pneg %p139
      $region18: #{autoformer_forward.1} parent=11 // pred_check_branch
        %353 = sbr.rel (%p351) target = $region20
      $region19: #{autoformer_forward.1} parent=11 // pred_region
        _
      $region20: #{autoformer_forward.1} parent=11 // pred_fallthru
        _
      // Predicated region
      $region21: #{autoformer_forward.1} parent=11 // pred_check
        %p354 = pneg %p160
      $region22: #{autoformer_forward.1} parent=11 // pred_check_branch
        %356 = sbr.rel (%p354) target = $region24
      $region23: #{autoformer_forward.1} parent=11 // pred_region
        _
      $region24: #{autoformer_forward.1} parent=11 // pred_fallthru
        _
      // Predicated region
      $region25: #{autoformer_forward.1} parent=11 // pred_check
        %p357 = pneg %p181
      $region26: #{autoformer_forward.1} parent=11 // pred_check_branch
        %359 = sbr.rel (%p357) target = $region28
      $region27: #{autoformer_forward.1} parent=11 // pred_region
        _
      $region28: #{autoformer_forward.1} parent=11 // pred_fallthru
        _
      // Predicated region
      $region29: #{autoformer_forward.1} parent=11 // pred_check
        %p360 = pneg %p202
      $region30: #{autoformer_forward.1} parent=11 // pred_check_branch
        %362 = sbr.rel (%p360) target = $region32
      $region31: #{autoformer_forward.1} parent=11 // pred_region
        _
      $region32: #{autoformer_forward.1} parent=11 // pred_fallthru
        _
      // Predicated region
      $region33: #{autoformer_forward.1} parent=11 // pred_check
        %p363 = pneg %p223
      $region34: #{autoformer_forward.1} parent=11 // pred_check_branch
        %365 = sbr.rel (%p363) target = $region36
      $region35: #{autoformer_forward.1} parent=11 // pred_region
        _
      $region36: #{autoformer_forward.1} parent=11 // pred_fallthru
        _
      // Predicated region
      $region37: #{autoformer_forward.1} parent=11 // pred_check
        %p366 = pneg %p244
      $region38: #{autoformer_forward.1} parent=11 // pred_check_branch
        %368 = sbr.rel (%p366) target = $region40
      $region39: #{autoformer_forward.1} parent=11 // pred_region
        _
      $region40: #{autoformer_forward.1} parent=11 // pred_fallthru
        _
      // Predicated region
      $region41: #{autoformer_forward.1} parent=11 // pred_check
        %p369 = pneg %p265
      $region42: #{autoformer_forward.1} parent=11 // pred_check_branch
        %371 = sbr.rel (%p369) target = $region44
      $region43: #{autoformer_forward.1} parent=11 // pred_region
        _
      $region44: #{autoformer_forward.1} parent=11 // pred_fallthru
        _
      // Predicated region
      $region45: #{autoformer_forward.1} parent=11 // pred_check
        %p372 = pneg %p286
      $region46: #{autoformer_forward.1} parent=11 // pred_check_branch
        %374 = sbr.rel (%p372) target = $region48
      $region47: #{autoformer_forward.1} parent=11 // pred_region
        _
      $region48: #{autoformer_forward.1} parent=11 // pred_fallthru
        _
      // Predicated region
      $region49: #{autoformer_forward.1} parent=11 // pred_check
        %p375 = pneg %p307
      $region50: #{autoformer_forward.1} parent=11 // pred_check_branch
        %377 = sbr.rel (%p375) target = $region52
      $region51: #{autoformer_forward.1} parent=11 // pred_region
        _
      $region52: #{autoformer_forward.1} parent=11 // pred_fallthru
        _
    $region12: #{autoformer_forward.1} parent=5 // pred_fallthru
      _
    %p378 = scmp.lt.s32.totalorder %s19, 2
    // Predicated region
    $region53: #{autoformer_forward.1} parent=5 // pred_check
      %p379 = pneg %p378
    $region54: #{autoformer_forward.1} parent=5 // pred_check_branch
      %381 = sbr.rel (%p379) target = $region56
    $region55: #{autoformer_forward.1} parent=5 // pred_region
      // Predicated region
      $region57: #{autoformer_forward.1} parent=55 // pred_check
        %p382 = pneg %p39
      $region58: #{autoformer_forward.1} parent=55 // pred_check_branch
        %384 = sbr.rel (%p382) target = $region60
      $region59: #{autoformer_forward.1} parent=55 // pred_region
        %p385 = scmp.lt.s32.totalorder %s19, 1
        %s386 = scalar_select %p385, %s19, 1
        %s387 = smul.addr %s386, 2
        %s388 = smul.addr %s387, 8
        %s389 = scalar_lea.vmem %s0, %s388
      $region60: #{autoformer_forward.1} parent=55 // pred_fallthru
        _
      // Predicated region
      $region61: #{autoformer_forward.1} parent=55 // pred_check
        %p390 = pneg %p65
      $region62: #{autoformer_forward.1} parent=55 // pred_check_branch
        %392 = sbr.rel (%p390) target = $region64
      $region63: #{autoformer_forward.1} parent=55 // pred_region
        %p393 = scmp.lt.s32.totalorder %s19, 1
        %s394 = scalar_select %p393, %s19, 1
        %s395 = smul.addr %s394, 2
        %s396 = smul.addr %s395, 8
        %s397 = scalar_lea.vmem %s1, %s396
      $region64: #{autoformer_forward.1} parent=55 // pred_fallthru
        _
      // Predicated region
      $region65: #{autoformer_forward.1} parent=55 // pred_check
        %p398 = pneg %p91
      $region66: #{autoformer_forward.1} parent=55 // pred_check_branch
        %400 = sbr.rel (%p398) target = $region68
      $region67: #{autoformer_forward.1} parent=55 // pred_region
        %p401 = scmp.lt.s32.totalorder %s19, 1
        %s402 = scalar_select %p401, %s19, 1
        %s403 = smul.addr %s402, 2
        %s404 = smul.addr %s403, 8
        %s405 = scalar_lea.vmem %s2, %s404
      $region68: #{autoformer_forward.1} parent=55 // pred_fallthru
        _
    $region56: #{autoformer_forward.1} parent=5 // pred_fallthru
      _
    %p406 = scmp.le.s32.totalorder 1, %s19
    %p407 = scmp.lt.s32.totalorder %s19, 3
    %p408 = pnand %p406, %p407
    %p409 = pneg %p408
    // Predicated region
    $region69: #{autoformer_forward.1} parent=5 // pred_check
      _
    $region70: #{autoformer_forward.1} parent=5 // pred_check_branch
      %411 = sbr.rel (%p408) target = $region72
    $region71: #{autoformer_forward.1} parent=5 // pred_region
      %s412 = ssub.s32 %s19, 1
      %p413 = scmp.lt.s32.totalorder %s24, 1
      %s414 = scalar_select %p413, %s24, 1
      %s415 = smul.addr %s414, 2
      %s416 = smul.addr %s415, 8
      %s417 = scalar_lea.vmem %s0, %s416
      %p418 = pneg %p45
      %p419 = pneg %p42
      %p420 = scmp.lt.s32.totalorder %s24, 1
      %s421 = scalar_select %p420, %s24, 1
      %s422 = smul.addr %s421, 2
      %s423 = smul.addr %s422, 8
      %s424 = scalar_lea.vmem %s1, %s423
      %p425 = pneg %p71
      %p426 = pneg %p68
      %p427 = scmp.lt.s32.totalorder %s24, 1
      %s428 = scalar_select %p427, %s24, 1
      %s429 = smul.addr %s428, 2
      %s430 = smul.addr %s429, 8
      %s431 = scalar_lea.vmem %s2, %s430
      %p432 = pneg %p97
      %p433 = pneg %p94
      %p434 = pneg %p118
      %p435 = pneg %p115
      %p436 = pneg %p139
      %p437 = pneg %p136
      %p438 = pneg %p160
      %p439 = pneg %p157
      %p440 = pneg %p181
      %p441 = pneg %p178
      %p442 = pneg %p202
      %p443 = pneg %p199
      %p444 = pneg %p223
      %p445 = pneg %p220
      %p446 = pneg %p244
      %p447 = pneg %p241
      %p448 = pneg %p265
      %p449 = pneg %p262
      %p450 = pneg %p286
      %p451 = pneg %p283
      %p452 = pneg %p307
      %p453 = pneg %p304
      %p454 = pneg %p333
      %p455 = pneg %p330
      %p456 = scmp.lt.s32.totalorder %s24, 1
      %s457 = scalar_select %p456, %s24, 1
      %s458 = smul.addr %s457, 2
      %s459 = smul.addr %s458, 8
      %s460 = scalar_lea.vmem %s13, %s459
      %p461 = scmp.lt.s32.totalorder %s24, 1
      %s462 = scalar_select %p461, %s24, 1
      %s463 = smul.addr %s462, 2
      %s464 = smul.addr %s463, 8
      %s465 = scalar_lea.vmem %s0, %s464
      %p466 = scmp.lt.s32.totalorder %s24, 1
      %s467 = scalar_select %p466, %s24, 1
      %s468 = smul.addr %s467, 2
      %s469 = smul.addr %s468, 8
      %s470 = scalar_lea.vmem %s1, %s469
      %p471 = scmp.lt.s32.totalorder %s24, 1
      %s472 = scalar_select %p471, %s24, 1
      %s473 = smul.addr %s472, 2
      %s474 = smul.addr %s473, 8
      %s475 = scalar_lea.vmem %s2, %s474
      %p476 = scmp.lt.s32.totalorder %s24, 1
      %s477 = scalar_select %p476, %s24, 1
      %s478 = smul.addr %s477, 2
      %s479 = smul.addr %s478, 8
      %s480 = scalar_lea.vmem %s13, %s479
      %v482 = vlaneseq
      %v483 = vshrl.u32 %v482, 7
      %v484 = vadd.s32 %v483, 8
      %v485 = vcvt.s32.f32 %v483
      %v486 = vcvt.s32.f32 %v484
      %v487 = vlaneseq
      %v488 = vand.u32 %v487, 127
      %v489 = vcvt.s32.f32 %v488
      %v490 = vld [vmem:[%s10] sm:$0xf]
      %v491 = vld [vmem:[%s10 + $0x4] sm:$0xf]
      %v492 = vld [vmem:[%s465] sm:$0xff]
      %v493 = vld [vmem:[%s465 + $0x8] sm:$0xff]
      %v494 = vld [vmem:[%s3] sm:$0xf]
      %v495 = vpack.c.bf16 %v493, %v492
      %v496 = vld [vmem:[%s4] sm:$0x1]
      %v498 = vperm.slane %v496, 0
      %vm500 = vcmask 64512
      %v502 = vsel %vm500, %v495, 0
      %vm504 = vcmask 1043456
      %v506 = vsel %vm504, %v494, 0
      %508 = vmatpush.bf16.msra.mxu0 0
      %509 = vmatpush.bf16.msra.mxu0 0
      %510 = vmatpush.bf16.msra.mxu0 0
      %511 = vmatpush.bf16.msra.mxu0 0
      %512 = vmatpush.bf16.msra.mxu0 0
      %513 = vmatpush.bf16.msra.mxu0 0
      %514 = vmatpush.bf16.msra.mxu0 0
      %515 = vmatpush.bf16.msra.mxu0 %v506
      %516 = vmatmul.bf16.gmra.mxu0 %v502
      %v517 = vpop.f32.mrf.mxu0
      %v518 = vadd.f32 %v498, %v517
      %v519 = vpop.f32.mrf.mxu0
      %v520 = vadd.f32 %v498, %v519
      %521 = vdwg.mxu0
      %v522 = vld [vmem:[%s5] sm:$0xf]
      %v523 = vld [vmem:[%s5 + $0x4] sm:$0xf]
      %v524 = vld [vmem:[%s5 + $0x8] sm:$0xf]
      %v525 = vld [vmem:[%s5 + $0xc] sm:$0xf]
      %v526 = vld [vmem:[%s6] sm:$0x1]
      %v527 = vpack.c.bf16 %v520, %v518
      %v529 = vperm.slane %v526, 0
      %v535 = vunpack.c.l.b16 %v522
      %v536 = vunpack.c.l.b16 %v523
      %v537 = vunpack.c.l.b16 %v524
      %v538 = vunpack.c.l.b16 %v525
      %v539 = vpack.c.b16 %v536, %v535
      %v540 = vpack.c.b16 %v538, %v537
      %vm543 = vcmask 261120
      %v545 = vsel %vm543, %v527, 0
      %547 = vmatpush.bf16.msra.mxu0 0
      %548 = vmatpush.bf16.msra.mxu0 0
      %549 = vmatpush.bf16.msra.mxu0 0
      %550 = vmatpush.bf16.msra.mxu0 0
      %551 = vmatpush.bf16.msra.mxu0 0
      %552 = vmatpush.bf16.msra.mxu0 0
      %553 = vmatpush.bf16.msra.mxu0 %v540
      %554 = vmatpush.bf16.msra.mxu0 %v539
      %555 = vmatmul.bf16.gmra.mxu0 %v545
      %v556 = vpop.f32.mrf.mxu0
      %v557 = vadd.f32 %v529, %v556
      %v558 = vpop.f32.mrf.mxu0
      %v559 = vadd.f32 %v529, %v558
      %560 = vdwg.mxu0
      %v561 = vpack.c.bf16 %v559, %v557
      %563 = vrot.lane.b32.xlu0 %v561, 96
      %v564 = vpop.permute.xlu0 %563
      %v566 = vsel %vm543, %v561, 0
      %v569 = vsel %vm543, %v564, 0
      %571 = vmatpush.bf16.xpose.msra.mxu0 0
      %572 = vmatpush.bf16.xpose.msra.mxu0 0
      %573 = vmatpush.bf16.xpose.msra.mxu0 0
      %574 = vmatpush.bf16.xpose.msra.mxu0 0
      %575 = vmatpush.bf16.xpose.msra.mxu0 0
      %576 = vmatpush.bf16.xpose.msra.mxu0 0
      %577 = vmatpush.bf16.xpose.msra.mxu0 0
      %578 = vmatpush.bf16.xpose.msra.mxu0 %v569
      %579 = vmatmul.bf16.gmra.mxu0 %v566
      %v580 = vpop.f32.mrf.mxu0
      %v581 = vadd.f32 0.0, %v580
      %v582 = vpop.f32.mrf.mxu0
      %v583 = vadd.f32 0.0, %v582
      %584 = vdwg.mxu0
      %vm585 = vcmask 130048
      %586 = vst.msk [vmem:[#allocation2] sm:$0xff] %vm585, %v581
      %587 = vst.msk [vmem:[#allocation2 + $0x8] sm:$0xff] %vm585, %v583
      %588 = vst.msk [vmem:[#allocation2 + $0x10] sm:$0xff] %vm585, %v581
      %589 = vst.msk [vmem:[#allocation2 + $0x18] sm:$0xff] %vm585, %v583
      %v590 = vld [vmem:[#allocation2] sm:$0xff]
      %v591 = vld [vmem:[#allocation2 + $0x8] sm:$0xff]
      %v592 = vld [vmem:[#allocation2 + $0x1] sm:$0xff]
      %v593 = vld [vmem:[#allocation2 + $0x9] sm:$0xff]
      %596 = vrot.lane.b32.xlu0 %v592, 127
      %v597 = vpop.permute.xlu0 %596
      %598 = vrot.lane.b32.xlu0 %v593, 127
      %v599 = vpop.permute.xlu0 %598
      %v602 = vadd.f32 %v590, %v597
      %v603 = vadd.f32 %v591, %v599
      %v604 = vld [vmem:[#allocation2 + $0x2] sm:$0xff]
      %v605 = vld [vmem:[#allocation2 + $0xa] sm:$0xff]
      %608 = vrot.lane.b32.xlu0 %v604, 126
      %v609 = vpop.permute.xlu0 %608
      %610 = vrot.lane.b32.xlu0 %v605, 126
      %v611 = vpop.permute.xlu0 %610
      %v614 = vadd.f32 %v602, %v609
      %v615 = vadd.f32 %v603, %v611
      %v616 = vld [vmem:[#allocation2 + $0x3] sm:$0xff]
      %v617 = vld [vmem:[#allocation2 + $0xb] sm:$0xff]
      %620 = vrot.lane.b32.xlu0 %v616, 125
      %v621 = vpop.permute.xlu0 %620
      %622 = vrot.lane.b32.xlu0 %v617, 125
      %v623 = vpop.permute.xlu0 %622
      %v626 = vadd.f32 %v614, %v621
      %v627 = vadd.f32 %v615, %v623
      %v628 = vld [vmem:[#allocation2 + $0x4] sm:$0xff]
      %v629 = vld [vmem:[#allocation2 + $0xc] sm:$0xff]
      %632 = vrot.lane.b32.xlu0 %v628, 124
      %v633 = vpop.permute.xlu0 %632
      %634 = vrot.lane.b32.xlu0 %v629, 124
      %v635 = vpop.permute.xlu0 %634
      %v638 = vadd.f32 %v626, %v633
      %v639 = vadd.f32 %v627, %v635
      %v640 = vld [vmem:[#allocation2 + $0x5] sm:$0xff]
      %v641 = vld [vmem:[#allocation2 + $0xd] sm:$0xff]
      %644 = vrot.lane.b32.xlu0 %v640, 123
      %v645 = vpop.permute.xlu0 %644
      %646 = vrot.lane.b32.xlu0 %v641, 123
      %v647 = vpop.permute.xlu0 %646
      %v650 = vadd.f32 %v638, %v645
      %v651 = vadd.f32 %v639, %v647
      %v652 = vld [vmem:[#allocation2 + $0x6] sm:$0xff]
      %v653 = vld [vmem:[#allocation2 + $0xe] sm:$0xff]
      %656 = vrot.lane.b32.xlu0 %v652, 122
      %v657 = vpop.permute.xlu0 %656
      %658 = vrot.lane.b32.xlu0 %v653, 122
      %v659 = vpop.permute.xlu0 %658
      %v662 = vadd.f32 %v650, %v657
      %v663 = vadd.f32 %v651, %v659
      %v664 = vld [vmem:[#allocation2 + $0x7] sm:$0xff]
      %v665 = vld [vmem:[#allocation2 + $0xf] sm:$0xff]
      %668 = vrot.lane.b32.xlu0 %v664, 121
      %v669 = vpop.permute.xlu0 %668
      %670 = vrot.lane.b32.xlu0 %v665, 121
      %v671 = vpop.permute.xlu0 %670
      %v674 = vadd.f32 %v662, %v669
      %v675 = vadd.f32 %v663, %v671
      %v676 = vld [vmem:[#allocation2 + $0x10] sm:$0xff]
      %679 = vrot.lane.b32.xlu0 %v591, 120
      %v680 = vpop.permute.xlu0 %679
      %681 = vrot.lane.b32.xlu0 %v676, 120
      %v682 = vpop.permute.xlu0 %681
      %v685 = vadd.f32 %v674, %v680
      %v686 = vadd.f32 %v675, %v682
      %v687 = vld [vmem:[#allocation2 + $0x11] sm:$0xff]
      %689 = vrot.lane.b32.xlu0 %v593, 119
      %v690 = vpop.permute.xlu0 %689
      %691 = vrot.lane.b32.xlu0 %v687, 119
      %v692 = vpop.permute.xlu0 %691
      %v695 = vadd.f32 %v685, %v690
      %v696 = vadd.f32 %v686, %v692
      %v697 = vld [vmem:[#allocation2 + $0x12] sm:$0xff]
      %699 = vrot.lane.b32.xlu0 %v605, 118
      %v700 = vpop.permute.xlu0 %699
      %701 = vrot.lane.b32.xlu0 %v697, 118
      %v702 = vpop.permute.xlu0 %701
      %v705 = vadd.f32 %v695, %v700
      %v706 = vadd.f32 %v696, %v702
      %v707 = vld [vmem:[#allocation2 + $0x13] sm:$0xff]
      %709 = vrot.lane.b32.xlu0 %v617, 117
      %v710 = vpop.permute.xlu0 %709
      %711 = vrot.lane.b32.xlu0 %v707, 117
      %v712 = vpop.permute.xlu0 %711
      %v715 = vadd.f32 %v705, %v710
      %v716 = vadd.f32 %v706, %v712
      %v717 = vld [vmem:[#allocation2 + $0x14] sm:$0xff]
      %719 = vrot.lane.b32.xlu0 %v629, 116
      %v720 = vpop.permute.xlu0 %719
      %721 = vrot.lane.b32.xlu0 %v717, 116
      %v722 = vpop.permute.xlu0 %721
      %v725 = vadd.f32 %v715, %v720
      %v726 = vadd.f32 %v716, %v722
      %v727 = vld [vmem:[#allocation2 + $0x15] sm:$0xff]
      %729 = vrot.lane.b32.xlu0 %v641, 115
      %v730 = vpop.permute.xlu0 %729
      %731 = vrot.lane.b32.xlu0 %v727, 115
      %v732 = vpop.permute.xlu0 %731
      %v735 = vadd.f32 %v725, %v730
      %v736 = vadd.f32 %v726, %v732
      %v737 = vld [vmem:[#allocation2 + $0x16] sm:$0xff]
      %739 = vrot.lane.b32.xlu0 %v653, 114
      %v740 = vpop.permute.xlu0 %739
      %741 = vrot.lane.b32.xlu0 %v737, 114
      %v742 = vpop.permute.xlu0 %741
      %v745 = vadd.f32 %v735, %v740
      %v746 = vadd.f32 %v736, %v742
      %v747 = vld [vmem:[#allocation2 + $0x17] sm:$0xff]
      %749 = vrot.lane.b32.xlu0 %v665, 113
      %v750 = vpop.permute.xlu0 %749
      %751 = vrot.lane.b32.xlu0 %v747, 113
      %v752 = vpop.permute.xlu0 %751
      %v755 = vadd.f32 %v745, %v750
      %v756 = vadd.f32 %v746, %v752
      %v757 = vmul.f32 %v755, 0.03125
      %v758 = vmul.f32 %v756, 0.03125
      %vm759 = vcmask 7168
      %v760 = vsel %vm759, %v757, -inf
      %v761 = vsel %vm759, %v758, -inf
      %v762 = vmax.f32 %v760, %v761
      %763 = vmax.xlane.f32.xlu0 %v762
      %v764 = vpop.xlane.xlu0 %763
      %v765 = vrot.slane %v764, 4
      %v766 = vmax.f32 %v764, %v765
      %v767 = vrot.slane %v766, 2
      %v768 = vmax.f32 %v766, %v767
      %v769 = vrot.slane %v768, 1
      %v770 = vmax.f32 %v768, %v769
      %s771 = vtos %v770
      %v772 = vstv %s771
      %v773 = vsub.f32 %v757, %v772
      %v774 = vsub.f32 %v758, %v772
      %v775 = vmul.f32 %v773, 1.442695
      %v776 = vpow.pop %v775
      %v777 = vmul.f32 %v774, 1.442695
      %v778 = vpow.pop %v777
      %vm779 = vcmp.eq.f32.partialorder %v757, %v772
      %vm780 = vcmp.eq.f32.partialorder %v758, %v772
      %v781 = vsel %vm779, %v485, 16.0
      %v782 = vsel %vm780, %v486, 16.0
      %v783 = vsel %vm759, %v781, inf
      %v784 = vsel %vm759, %v782, inf
      %v785 = vmin.f32 %v783, %v784
      %786 = vmin.xlane.f32.xlu0 %v785
      %v787 = vpop.xlane.xlu0 %786
      %v788 = vrot.slane %v787, 4
      %v789 = vmin.f32 %v787, %v788
      %v790 = vrot.slane %v789, 2
      %v791 = vmin.f32 %v789, %v790
      %v792 = vrot.slane %v791, 1
      %v793 = vmin.f32 %v791, %v792
      %s794 = vtos %v793
      %v795 = vstv %s794
      %vm796 = vcmp.eq.f32.partialorder %v485, %v795
      %vm797 = vcmp.eq.f32.partialorder %v486, %v795
      %v798 = vsel %vm796, %v776, 0.0
      %v799 = vsel %vm797, %v778, 0.0
      %v800 = vsel %vm759, %v798, 0.0
      %v801 = vsel %vm759, %v799, 0.0
      %v802 = vadd.f32 %v800, %v801
      %803 = vadd.xlane.f32.xlu0 %v802
      %v804 = vpop.xlane.xlu0 %803
      %v805 = vrot.slane %v804, 4
      %v806 = vadd.f32 %v804, %v805
      %v807 = vrot.slane %v806, 2
      %v808 = vadd.f32 %v806, %v807
      %v809 = vrot.slane %v808, 1
      %v810 = vadd.f32 %v808, %v809
      %s811 = vtos %v810
      %v812 = vadd.f32 %v485, %v795
      %v813 = vadd.f32 %v486, %v795
      %vm814 = vcmp.ge.f32.partialorder %v812, 16.0
      %vm815 = vcmp.ge.f32.partialorder %v813, 16.0
      %v816 = vsub.f32 %v812, 16.0
      %v817 = vsub.f32 %v813, 16.0
      %v818 = vsel %vm814, %v816, %v812
      %v819 = vsel %vm815, %v817, %v813
      %vm820 = vcmp.eq.f32.partialorder %v818, %v489
      %vm821 = vcmp.eq.f32.partialorder %v819, %v489
      %v822 = vsel %vm820, 1, 0
      %v823 = vsel %vm821, 1, 0
      %v824 = vcvt.s32.f32 %v822
      %v825 = vcvt.s32.f32 %v823
      %v826 = vstv %s811
      %v827 = vmul.f32 %v826, %v824
      %v828 = vmul.f32 %v826, %v825
      %v829 = vadd.f32 %v827, 0.0
      %v830 = vadd.f32 %v828, 0.0
      %v831 = vadd.f32 %v826, 0.0
      %v832 = vsel %vm796, -1e+30, %v757
      %v833 = vsel %vm797, -1e+30, %v758
      %v834 = vsel %vm759, %v832, -inf
      %v835 = vsel %vm759, %v833, -inf
      %v836 = vmax.f32 %v834, %v835
      %837 = vmax.xlane.f32.xlu0 %v836
      %v838 = vpop.xlane.xlu0 %837
      %v839 = vrot.slane %v838, 4
      %v840 = vmax.f32 %v838, %v839
      %v841 = vrot.slane %v840, 2
      %v842 = vmax.f32 %v840, %v841
      %v843 = vrot.slane %v842, 1
      %v844 = vmax.f32 %v842, %v843
      %s845 = vtos %v844
      %v846 = vstv %s845
      %vm847 = vcmp.eq.f32.partialorder %v832, %v846
      %vm848 = vcmp.eq.f32.partialorder %v833, %v846
      %v849 = vsel %vm847, %v485, 16.0
      %v850 = vsel %vm848, %v486, 16.0
      %v851 = vsel %vm759, %v849, inf
      %v852 = vsel %vm759, %v850, inf
      %v853 = vmin.f32 %v851, %v852
      %854 = vmin.xlane.f32.xlu0 %v853
      %v855 = vpop.xlane.xlu0 %854
      %v856 = vrot.slane %v855, 4
      %v857 = vmin.f32 %v855, %v856
      %v858 = vrot.slane %v857, 2
      %v859 = vmin.f32 %v857, %v858
      %v860 = vrot.slane %v859, 1
      %v861 = vmin.f32 %v859, %v860
      %s862 = vtos %v861
      %v863 = vstv %s862
      %vm864 = vcmp.eq.f32.partialorder %v485, %v863
      %vm865 = vcmp.eq.f32.partialorder %v486, %v863
      %v866 = vsel %vm864, %v776, 0.0
      %v867 = vsel %vm865, %v778, 0.0
      %v868 = vsel %vm759, %v866, 0.0
      %v869 = vsel %vm759, %v867, 0.0
      %v870 = vadd.f32 %v868, %v869
      %871 = vadd.xlane.f32.xlu0 %v870
      %v872 = vpop.xlane.xlu0 %871
      %v873 = vrot.slane %v872, 4
      %v874 = vadd.f32 %v872, %v873
      %v875 = vrot.slane %v874, 2
      %v876 = vadd.f32 %v874, %v875
      %v877 = vrot.slane %v876, 1
      %v878 = vadd.f32 %v876, %v877
      %s879 = vtos %v878
      %v880 = vadd.f32 %v485, %v863
      %v881 = vadd.f32 %v486, %v863
      %vm882 = vcmp.ge.f32.partialorder %v880, 16.0
      %vm883 = vcmp.ge.f32.partialorder %v881, 16.0
      %v884 = vsub.f32 %v880, 16.0
      %v885 = vsub.f32 %v881, 16.0
      %v886 = vsel %vm882, %v884, %v880
      %v887 = vsel %vm883, %v885, %v881
      %vm888 = vcmp.eq.f32.partialorder %v886, %v489
      %vm889 = vcmp.eq.f32.partialorder %v887, %v489
      %v890 = vsel %vm888, 1, 0
      %v891 = vsel %vm889, 1, 0
      %v892 = vcvt.s32.f32 %v890
      %v893 = vcvt.s32.f32 %v891
      %v894 = vstv %s879
      %v895 = vmul.f32 %v894, %v892
      %v896 = vmul.f32 %v894, %v893
      %v897 = vadd.f32 %v829, %v895
      %v898 = vadd.f32 %v830, %v896
      %v899 = vadd.f32 %v831, %v894
      %v900 = vrcp.pop %v899
      %v901 = vmul.f32 %v897, %v900
      %v902 = vmul.f32 %v898, %v900
      %v903 = vpack.c.bf16 %v902, %v901
      %904 = vrot.lane.b32.xlu0 %v561, 64
      %v905 = vpop.permute.xlu0 %904
      %v908 = vsel %vm585, %v903, 0
      %910 = vmatpush.bf16.msra.mxu0 0
      %911 = vmatpush.bf16.msra.mxu0 0
      %912 = vmatpush.bf16.msra.mxu0 0
      %913 = vmatpush.bf16.msra.mxu0 0
      %914 = vmatpush.bf16.msra.mxu0 0
      %915 = vmatpush.bf16.msra.mxu0 0
      %916 = vmatpush.bf16.msra.mxu0 0
      %917 = vmatpush.bf16.msra.mxu0 %v905
      %918 = vmatmul.bf16.gmra.mxu0 %v908
      %v919 = vpop.f32.mrf.mxu0
      %v920 = vadd.f32 0.0, %v919
      %v921 = vpop.f32.mrf.mxu0
      %v922 = vadd.f32 0.0, %v921
      %923 = vdwg.mxu0
      %v924 = vpack.c.bf16 %v922, %v920
      %925 = vrot.lane.b32.xlu0 %v539, 32
      %v926 = vpop.permute.xlu0 %925
      %927 = vrot.lane.b32.xlu0 %v540, 32
      %v928 = vpop.permute.xlu0 %927
      %931 = vrot.lane.b32.xlu0 %v529, 32
      %v932 = vpop.permute.xlu0 %931
      %v935 = vsel %vm543, %v924, 0
      %937 = vmatpush.bf16.msra.mxu0 0
      %938 = vmatpush.bf16.msra.mxu0 0
      %939 = vmatpush.bf16.msra.mxu0 0
      %940 = vmatpush.bf16.msra.mxu0 0
      %941 = vmatpush.bf16.msra.mxu0 0
      %942 = vmatpush.bf16.msra.mxu0 0
      %943 = vmatpush.bf16.msra.mxu0 %v928
      %944 = vmatpush.bf16.msra.mxu0 %v926
      %945 = vmatmul.bf16.gmra.mxu0 %v935
      %v946 = vpop.f32.mrf.mxu0
      %v947 = vadd.f32 %v932, %v946
      %v948 = vpop.f32.mrf.mxu0
      %v949 = vadd.f32 %v932, %v948
      %950 = vdwg.mxu0
      %v951 = vadd.f32 %v518, %v947
      %v952 = vadd.f32 %v520, %v949
      %v953 = vpack.c.bf16 %v952, %v951
      %v956 = vunpack.c.l.b16 %v490
      %v957 = vunpack.c.l.b16 %v491
      %v958 = vpack.c.b16 %v957, %v956
      %v960 = vsel %vm585, %v958, 0
      %962 = vmatpush.bf16.msra.mxu0 0
      %963 = vmatpush.bf16.msra.mxu0 0
      %964 = vmatpush.bf16.msra.mxu0 0
      %965 = vmatpush.bf16.msra.mxu0 0
      %966 = vmatpush.bf16.msra.mxu0 0
      %967 = vmatpush.bf16.msra.mxu0 0
      %968 = vmatpush.bf16.msra.mxu0 0
      %969 = vmatpush.bf16.msra.mxu0 %v953
      %970 = vmatmul.bf16.gmra.mxu0 %v960
      %v971 = vpop.f32.mrf.mxu0
      %v972 = vadd.f32 0.0, %v971
      %v973 = vpop.f32.mrf.mxu0
      %v974 = vadd.f32 0.0, %v973
      %975 = vdwg.mxu0
      %v976 = vsub.f32 %v951, %v972
      %v977 = vsub.f32 %v952, %v974
      %v978 = vld [vmem:[%s7] sm:$0xf]
      %v979 = vld [vmem:[%s7 + $0x4] sm:$0xf]
      %v980 = vld [vmem:[%s7 + $0x8] sm:$0xf]
      %v981 = vld [vmem:[%s7 + $0xc] sm:$0xf]
      %v982 = vpack.c.bf16 %v977, %v976
      %v987 = vunpack.c.l.b16 %v978
      %v988 = vunpack.c.l.b16 %v979
      %v989 = vunpack.c.l.b16 %v980
      %v990 = vunpack.c.l.b16 %v981
      %v991 = vpack.c.b16 %v988, %v987
      %v992 = vpack.c.b16 %v990, %v989
      %v996 = vsel %vm543, %v982, 0
      %998 = vmatpush.bf16.msra.mxu0 0
      %999 = vmatpush.bf16.msra.mxu0 0
      %1000 = vmatpush.bf16.msra.mxu0 0
      %1001 = vmatpush.bf16.msra.mxu0 0
      %1002 = vmatpush.bf16.msra.mxu0 0
      %1003 = vmatpush.bf16.msra.mxu0 0
      %1004 = vmatpush.bf16.msra.mxu0 %v992
      %1005 = vmatpush.bf16.msra.mxu0 %v991
      %1006 = vmatmul.bf16.gmra.mxu0 %v996
      %v1007 = vpop.f32.mrf.mxu0
      %v1008 = vadd.f32 0.0, %v1007
      %v1009 = vpop.f32.mrf.mxu0
      %v1010 = vadd.f32 0.0, %v1009
      %1011 = vdwg.mxu0
      %v1012 = vmax.f32 %v1008, 0.0
      %v1013 = vmax.f32 %v1010, 0.0
      %v1014 = vld [vmem:[%s8] sm:$0xf]
      %v1015 = vld [vmem:[%s8 + $0x4] sm:$0xf]
      %v1016 = vld [vmem:[%s8 + $0x8] sm:$0xf]
      %v1017 = vld [vmem:[%s8 + $0xc] sm:$0xf]
      %v1018 = vld [vmem:[%s8 + $0x10] sm:$0xf]
      %v1019 = vld [vmem:[%s8 + $0x14] sm:$0xf]
      %v1020 = vld [vmem:[%s8 + $0x18] sm:$0xf]
      %v1021 = vld [vmem:[%s8 + $0x1c] sm:$0xf]
      %v1022 = vpack.c.bf16 %v1013, %v1012
      %v1031 = vunpack.c.l.b16 %v1014
      %v1032 = vunpack.c.l.b16 %v1015
      %v1033 = vunpack.c.l.b16 %v1016
      %v1034 = vunpack.c.l.b16 %v1017
      %v1035 = vunpack.c.l.b16 %v1018
      %v1036 = vunpack.c.l.b16 %v1019
      %v1037 = vunpack.c.l.b16 %v1020
      %v1038 = vunpack.c.l.b16 %v1021
      %v1039 = vpack.c.b16 %v1032, %v1031
      %v1040 = vpack.c.b16 %v1034, %v1033
      %v1041 = vpack.c.b16 %v1036, %v1035
      %v1042 = vpack.c.b16 %v1038, %v1037
      %vm1047 = vcmask 523264
      %v1049 = vsel %vm1047, %v1022, 0
      %1051 = vmatpush.bf16.msra.mxu0 0
      %1052 = vmatpush.bf16.msra.mxu0 0
      %1053 = vmatpush.bf16.msra.mxu0 0
      %1054 = vmatpush.bf16.msra.mxu0 0
      %1055 = vmatpush.bf16.msra.mxu0 %v1042
      %1056 = vmatpush.bf16.msra.mxu0 %v1041
      %1057 = vmatpush.bf16.msra.mxu0 %v1040
      %1058 = vmatpush.bf16.msra.mxu0 %v1039
      %1059 = vmatmul.bf16.gmra.mxu0 %v1049
      %v1060 = vpop.f32.mrf.mxu0
      %v1061 = vadd.f32 0.0, %v1060
      %v1062 = vpop.f32.mrf.mxu0
      %v1063 = vadd.f32 0.0, %v1062
      %1064 = vdwg.mxu0
      %v1065 = vadd.f32 %v976, %v1061
      %v1066 = vadd.f32 %v977, %v1063
      %v1067 = vpack.c.bf16 %v1066, %v1065
      %1068 = vmatpush.bf16.msra.mxu0 0
      %1069 = vmatpush.bf16.msra.mxu0 0
      %1070 = vmatpush.bf16.msra.mxu0 0
      %1071 = vmatpush.bf16.msra.mxu0 0
      %1072 = vmatpush.bf16.msra.mxu0 0
      %1073 = vmatpush.bf16.msra.mxu0 0
      %1074 = vmatpush.bf16.msra.mxu0 0
      %1075 = vmatpush.bf16.msra.mxu0 %v1067
      %1076 = vmatmul.bf16.gmra.mxu0 %v960
      %v1077 = vpop.f32.mrf.mxu0
      %v1078 = vadd.f32 0.0, %v1077
      %v1079 = vpop.f32.mrf.mxu0
      %v1080 = vadd.f32 0.0, %v1079
      %1081 = vdwg.mxu0
      %v1082 = vsub.f32 %v1065, %v1078
      %v1083 = vsub.f32 %v1066, %v1080
      %s1084 = scalar_lea.vmem %s5, 16
      %v1085 = vld [vmem:[%s1084] sm:$0xf]
      %v1086 = vld [vmem:[%s1084 + $0x4] sm:$0xf]
      %v1087 = vld [vmem:[%s1084 + $0x8] sm:$0xf]
      %v1088 = vld [vmem:[%s1084 + $0xc] sm:$0xf]
      %s1089 = scalar_lea.vmem %s6, 1
      %v1090 = vld [vmem:[%s1089] sm:$0x1]
      %v1091 = vpack.c.bf16 %v1083, %v1082
      %v1093 = vperm.slane %v1090, 0
      %v1099 = vunpack.c.l.b16 %v1085
      %v1100 = vunpack.c.l.b16 %v1086
      %v1101 = vunpack.c.l.b16 %v1087
      %v1102 = vunpack.c.l.b16 %v1088
      %v1103 = vpack.c.b16 %v1100, %v1099
      %v1104 = vpack.c.b16 %v1102, %v1101
      %v1108 = vsel %vm543, %v1091, 0
      %1110 = vmatpush.bf16.msra.mxu0 0
      %1111 = vmatpush.bf16.msra.mxu0 0
      %1112 = vmatpush.bf16.msra.mxu0 0
      %1113 = vmatpush.bf16.msra.mxu0 0
      %1114 = vmatpush.bf16.msra.mxu0 0
      %1115 = vmatpush.bf16.msra.mxu0 0
      %1116 = vmatpush.bf16.msra.mxu0 %v1104
      %1117 = vmatpush.bf16.msra.mxu0 %v1103
      %1118 = vmatmul.bf16.gmra.mxu0 %v1108
      %v1119 = vpop.f32.mrf.mxu0
      %v1120 = vadd.f32 %v1093, %v1119
      %v1121 = vpop.f32.mrf.mxu0
      %v1122 = vadd.f32 %v1093, %v1121
      %1123 = vdwg.mxu0
      %v1124 = vpack.c.bf16 %v1122, %v1120
      %1126 = vrot.lane.b32.xlu0 %v1124, 96
      %v1127 = vpop.permute.xlu0 %1126
      %v1129 = vsel %vm543, %v1124, 0
      %v1132 = vsel %vm543, %v1127, 0
      %1134 = vmatpush.bf16.xpose.msra.mxu0 0
      %1135 = vmatpush.bf16.xpose.msra.mxu0 0
      %1136 = vmatpush.bf16.xpose.msra.mxu0 0
      %1137 = vmatpush.bf16.xpose.msra.mxu0 0
      %1138 = vmatpush.bf16.xpose.msra.mxu0 0
      %1139 = vmatpush.bf16.xpose.msra.mxu0 0
      %1140 = vmatpush.bf16.xpose.msra.mxu0 0
      %1141 = vmatpush.bf16.xpose.msra.mxu0 %v1132
      %1142 = vmatmul.bf16.gmra.mxu0 %v1129
      %v1143 = vpop.f32.mrf.mxu0
      %v1144 = vadd.f32 0.0, %v1143
      %v1145 = vpop.f32.mrf.mxu0
      %v1146 = vadd.f32 0.0, %v1145
      %1147 = vdwg.mxu0
      %1148 = vst.msk [vmem:[#allocation2] sm:$0xff] %vm585, %v1144
      %1149 = vst.msk [vmem:[#allocation2 + $0x8] sm:$0xff] %vm585, %v1146
      %1150 = vst.msk [vmem:[#allocation2 + $0x10] sm:$0xff] %vm585, %v1144
      %1151 = vst.msk [vmem:[#allocation2 + $0x18] sm:$0xff] %vm585, %v1146
      %v1152 = vld [vmem:[#allocation2] sm:$0xff]
      %v1153 = vld [vmem:[#allocation2 + $0x8] sm:$0xff]
      %v1154 = vld [vmem:[#allocation2 + $0x1] sm:$0xff]
      %v1155 = vld [vmem:[#allocation2 + $0x9] sm:$0xff]
      %1158 = vrot.lane.b32.xlu0 %v1154, 127
      %v1159 = vpop.permute.xlu0 %1158
      %1160 = vrot.lane.b32.xlu0 %v1155, 127
      %v1161 = vpop.permute.xlu0 %1160
      %v1164 = vadd.f32 %v1152, %v1159
      %v1165 = vadd.f32 %v1153, %v1161
      %v1166 = vld [vmem:[#allocation2 + $0x2] sm:$0xff]
      %v1167 = vld [vmem:[#allocation2 + $0xa] sm:$0xff]
      %1170 = vrot.lane.b32.xlu0 %v1166, 126
      %v1171 = vpop.permute.xlu0 %1170
      %1172 = vrot.lane.b32.xlu0 %v1167, 126
      %v1173 = vpop.permute.xlu0 %1172
      %v1176 = vadd.f32 %v1164, %v1171
      %v1177 = vadd.f32 %v1165, %v1173
      %v1178 = vld [vmem:[#allocation2 + $0x3] sm:$0xff]
      %v1179 = vld [vmem:[#allocation2 + $0xb] sm:$0xff]
      %1182 = vrot.lane.b32.xlu0 %v1178, 125
      %v1183 = vpop.permute.xlu0 %1182
      %1184 = vrot.lane.b32.xlu0 %v1179, 125
      %v1185 = vpop.permute.xlu0 %1184
      %v1188 = vadd.f32 %v1176, %v1183
      %v1189 = vadd.f32 %v1177, %v1185
      %v1190 = vld [vmem:[#allocation2 + $0x4] sm:$0xff]
      %v1191 = vld [vmem:[#allocation2 + $0xc] sm:$0xff]
      %1194 = vrot.lane.b32.xlu0 %v1190, 124
      %v1195 = vpop.permute.xlu0 %1194
      %1196 = vrot.lane.b32.xlu0 %v1191, 124
      %v1197 = vpop.permute.xlu0 %1196
      %v1200 = vadd.f32 %v1188, %v1195
      %v1201 = vadd.f32 %v1189, %v1197
      %v1202 = vld [vmem:[#allocation2 + $0x5] sm:$0xff]
      %v1203 = vld [vmem:[#allocation2 + $0xd] sm:$0xff]
      %1206 = vrot.lane.b32.xlu0 %v1202, 123
      %v1207 = vpop.permute.xlu0 %1206
      %1208 = vrot.lane.b32.xlu0 %v1203, 123
      %v1209 = vpop.permute.xlu0 %1208
      %v1212 = vadd.f32 %v1200, %v1207
      %v1213 = vadd.f32 %v1201, %v1209
      %v1214 = vld [vmem:[#allocation2 + $0x6] sm:$0xff]
      %v1215 = vld [vmem:[#allocation2 + $0xe] sm:$0xff]
      %1218 = vrot.lane.b32.xlu0 %v1214, 122
      %v1219 = vpop.permute.xlu0 %1218
      %1220 = vrot.lane.b32.xlu0 %v1215, 122
      %v1221 = vpop.permute.xlu0 %1220
      %v1224 = vadd.f32 %v1212, %v1219
      %v1225 = vadd.f32 %v1213, %v1221
      %v1226 = vld [vmem:[#allocation2 + $0x7] sm:$0xff]
      %v1227 = vld [vmem:[#allocation2 + $0xf] sm:$0xff]
      %1230 = vrot.lane.b32.xlu0 %v1226, 121
      %v1231 = vpop.permute.xlu0 %1230
      %1232 = vrot.lane.b32.xlu0 %v1227, 121
      %v1233 = vpop.permute.xlu0 %1232
      %v1236 = vadd.f32 %v1224, %v1231
      %v1237 = vadd.f32 %v1225, %v1233
      %v1238 = vld [vmem:[#allocation2 + $0x10] sm:$0xff]
      %1241 = vrot.lane.b32.xlu0 %v1153, 120
      %v1242 = vpop.permute.xlu0 %1241
      %1243 = vrot.lane.b32.xlu0 %v1238, 120
      %v1244 = vpop.permute.xlu0 %1243
      %v1247 = vadd.f32 %v1236, %v1242
      %v1248 = vadd.f32 %v1237, %v1244
      %v1249 = vld [vmem:[#allocation2 + $0x11] sm:$0xff]
      %1251 = vrot.lane.b32.xlu0 %v1155, 119
      %v1252 = vpop.permute.xlu0 %1251
      %1253 = vrot.lane.b32.xlu0 %v1249, 119
      %v1254 = vpop.permute.xlu0 %1253
      %v1257 = vadd.f32 %v1247, %v1252
      %v1258 = vadd.f32 %v1248, %v1254
      %v1259 = vld [vmem:[#allocation2 + $0x12] sm:$0xff]
      %1261 = vrot.lane.b32.xlu0 %v1167, 118
      %v1262 = vpop.permute.xlu0 %1261
      %1263 = vrot.lane.b32.xlu0 %v1259, 118
      %v1264 = vpop.permute.xlu0 %1263
      %v1267 = vadd.f32 %v1257, %v1262
      %v1268 = vadd.f32 %v1258, %v1264
      %v1269 = vld [vmem:[#allocation2 + $0x13] sm:$0xff]
      %1271 = vrot.lane.b32.xlu0 %v1179, 117
      %v1272 = vpop.permute.xlu0 %1271
      %1273 = vrot.lane.b32.xlu0 %v1269, 117
      %v1274 = vpop.permute.xlu0 %1273
      %v1277 = vadd.f32 %v1267, %v1272
      %v1278 = vadd.f32 %v1268, %v1274
      %v1279 = vld [vmem:[#allocation2 + $0x14] sm:$0xff]
      %1281 = vrot.lane.b32.xlu0 %v1191, 116
      %v1282 = vpop.permute.xlu0 %1281
      %1283 = vrot.lane.b32.xlu0 %v1279, 116
      %v1284 = vpop.permute.xlu0 %1283
      %v1287 = vadd.f32 %v1277, %v1282
      %v1288 = vadd.f32 %v1278, %v1284
      %v1289 = vld [vmem:[#allocation2 + $0x15] sm:$0xff]
      %1291 = vrot.lane.b32.xlu0 %v1203, 115
      %v1292 = vpop.permute.xlu0 %1291
      %1293 = vrot.lane.b32.xlu0 %v1289, 115
      %v1294 = vpop.permute.xlu0 %1293
      %v1297 = vadd.f32 %v1287, %v1292
      %v1298 = vadd.f32 %v1288, %v1294
      %v1299 = vld [vmem:[#allocation2 + $0x16] sm:$0xff]
      %1301 = vrot.lane.b32.xlu0 %v1215, 114
      %v1302 = vpop.permute.xlu0 %1301
      %1303 = vrot.lane.b32.xlu0 %v1299, 114
      %v1304 = vpop.permute.xlu0 %1303
      %v1307 = vadd.f32 %v1297, %v1302
      %v1308 = vadd.f32 %v1298, %v1304
      %v1309 = vld [vmem:[#allocation2 + $0x17] sm:$0xff]
      %1311 = vrot.lane.b32.xlu0 %v1227, 113
      %v1312 = vpop.permute.xlu0 %1311
      %1313 = vrot.lane.b32.xlu0 %v1309, 113
      %v1314 = vpop.permute.xlu0 %1313
      %v1317 = vadd.f32 %v1307, %v1312
      %v1318 = vadd.f32 %v1308, %v1314
      %v1319 = vmul.f32 %v1317, 0.03125
      %v1320 = vmul.f32 %v1318, 0.03125
      %v1321 = vsel %vm759, %v1319, -inf
      %v1322 = vsel %vm759, %v1320, -inf
      %v1323 = vmax.f32 %v1321, %v1322
      %1324 = vmax.xlane.f32.xlu0 %v1323
      %v1325 = vpop.xlane.xlu0 %1324
      %v1326 = vrot.slane %v1325, 4
      %v1327 = vmax.f32 %v1325, %v1326
      %v1328 = vrot.slane %v1327, 2
      %v1329 = vmax.f32 %v1327, %v1328
      %v1330 = vrot.slane %v1329, 1
      %v1331 = vmax.f32 %v1329, %v1330
      %s1332 = vtos %v1331
      %v1333 = vstv %s1332
      %v1334 = vsub.f32 %v1319, %v1333
      %v1335 = vsub.f32 %v1320, %v1333
      %v1336 = vmul.f32 %v1334, 1.442695
      %v1337 = vpow.pop %v1336
      %v1338 = vmul.f32 %v1335, 1.442695
      %v1339 = vpow.pop %v1338
      %vm1340 = vcmp.eq.f32.partialorder %v1319, %v1333
      %vm1341 = vcmp.eq.f32.partialorder %v1320, %v1333
      %v1342 = vsel %vm1340, %v485, 16.0
      %v1343 = vsel %vm1341, %v486, 16.0
      %v1344 = vsel %vm759, %v1342, inf
      %v1345 = vsel %vm759, %v1343, inf
      %v1346 = vmin.f32 %v1344, %v1345
      %1347 = vmin.xlane.f32.xlu0 %v1346
      %v1348 = vpop.xlane.xlu0 %1347
      %v1349 = vrot.slane %v1348, 4
      %v1350 = vmin.f32 %v1348, %v1349
      %v1351 = vrot.slane %v1350, 2
      %v1352 = vmin.f32 %v1350, %v1351
      %v1353 = vrot.slane %v1352, 1
      %v1354 = vmin.f32 %v1352, %v1353
      %s1355 = vtos %v1354
      %v1356 = vstv %s1355
      %vm1357 = vcmp.eq.f32.partialorder %v485, %v1356
      %vm1358 = vcmp.eq.f32.partialorder %v486, %v1356
      %v1359 = vsel %vm1357, %v1337, 0.0
      %v1360 = vsel %vm1358, %v1339, 0.0
      %v1361 = vsel %vm759, %v1359, 0.0
      %v1362 = vsel %vm759, %v1360, 0.0
      %v1363 = vadd.f32 %v1361, %v1362
      %1364 = vadd.xlane.f32.xlu0 %v1363
      %v1365 = vpop.xlane.xlu0 %1364
      %v1366 = vrot.slane %v1365, 4
      %v1367 = vadd.f32 %v1365, %v1366
      %v1368 = vrot.slane %v1367, 2
      %v1369 = vadd.f32 %v1367, %v1368
      %v1370 = vrot.slane %v1369, 1
      %v1371 = vadd.f32 %v1369, %v1370
      %s1372 = vtos %v1371
      %v1373 = vadd.f32 %v485, %v1356
      %v1374 = vadd.f32 %v486, %v1356
      %vm1375 = vcmp.ge.f32.partialorder %v1373, 16.0
      %vm1376 = vcmp.ge.f32.partialorder %v1374, 16.0
      %v1377 = vsub.f32 %v1373, 16.0
      %v1378 = vsub.f32 %v1374, 16.0
      %v1379 = vsel %vm1375, %v1377, %v1373
      %v1380 = vsel %vm1376, %v1378, %v1374
      %vm1381 = vcmp.eq.f32.partialorder %v1379, %v489
      %vm1382 = vcmp.eq.f32.partialorder %v1380, %v489
      %v1383 = vsel %vm1381, 1, 0
      %v1384 = vsel %vm1382, 1, 0
      %v1385 = vcvt.s32.f32 %v1383
      %v1386 = vcvt.s32.f32 %v1384
      %v1387 = vstv %s1372
      %v1388 = vmul.f32 %v1387, %v1385
      %v1389 = vmul.f32 %v1387, %v1386
      %v1390 = vadd.f32 %v1388, 0.0
      %v1391 = vadd.f32 %v1389, 0.0
      %v1392 = vadd.f32 %v1387, 0.0
      %v1393 = vsel %vm1357, -1e+30, %v1319
      %v1394 = vsel %vm1358, -1e+30, %v1320
      %v1395 = vsel %vm759, %v1393, -inf
      %v1396 = vsel %vm759, %v1394, -inf
      %v1397 = vmax.f32 %v1395, %v1396
      %1398 = vmax.xlane.f32.xlu0 %v1397
      %v1399 = vpop.xlane.xlu0 %1398
      %v1400 = vrot.slane %v1399, 4
      %v1401 = vmax.f32 %v1399, %v1400
      %v1402 = vrot.slane %v1401, 2
      %v1403 = vmax.f32 %v1401, %v1402
      %v1404 = vrot.slane %v1403, 1
      %v1405 = vmax.f32 %v1403, %v1404
      %s1406 = vtos %v1405
      %v1407 = vstv %s1406
      %vm1408 = vcmp.eq.f32.partialorder %v1393, %v1407
      %vm1409 = vcmp.eq.f32.partialorder %v1394, %v1407
      %v1410 = vsel %vm1408, %v485, 16.0
      %v1411 = vsel %vm1409, %v486, 16.0
      %v1412 = vsel %vm759, %v1410, inf
      %v1413 = vsel %vm759, %v1411, inf
      %v1414 = vmin.f32 %v1412, %v1413
      %1415 = vmin.xlane.f32.xlu0 %v1414
      %v1416 = vpop.xlane.xlu0 %1415
      %v1417 = vrot.slane %v1416, 4
      %v1418 = vmin.f32 %v1416, %v1417
      %v1419 = vrot.slane %v1418, 2
      %v1420 = vmin.f32 %v1418, %v1419
      %v1421 = vrot.slane %v1420, 1
      %v1422 = vmin.f32 %v1420, %v1421
      %s1423 = vtos %v1422
      %v1424 = vstv %s1423
      %vm1425 = vcmp.eq.f32.partialorder %v485, %v1424
      %vm1426 = vcmp.eq.f32.partialorder %v486, %v1424
      %v1427 = vsel %vm1425, %v1337, 0.0
      %v1428 = vsel %vm1426, %v1339, 0.0
      %v1429 = vsel %vm759, %v1427, 0.0
      %v1430 = vsel %vm759, %v1428, 0.0
      %v1431 = vadd.f32 %v1429, %v1430
      %1432 = vadd.xlane.f32.xlu0 %v1431
      %v1433 = vpop.xlane.xlu0 %1432
      %v1434 = vrot.slane %v1433, 4
      %v1435 = vadd.f32 %v1433, %v1434
      %v1436 = vrot.slane %v1435, 2
      %v1437 = vadd.f32 %v1435, %v1436
      %v1438 = vrot.slane %v1437, 1
      %v1439 = vadd.f32 %v1437, %v1438
      %s1440 = vtos %v1439
      %v1441 = vadd.f32 %v485, %v1424
      %v1442 = vadd.f32 %v486, %v1424
      %vm1443 = vcmp.ge.f32.partialorder %v1441, 16.0
      %vm1444 = vcmp.ge.f32.partialorder %v1442, 16.0
      %v1445 = vsub.f32 %v1441, 16.0
      %v1446 = vsub.f32 %v1442, 16.0
      %v1447 = vsel %vm1443, %v1445, %v1441
      %v1448 = vsel %vm1444, %v1446, %v1442
      %vm1449 = vcmp.eq.f32.partialorder %v1447, %v489
      %vm1450 = vcmp.eq.f32.partialorder %v1448, %v489
      %v1451 = vsel %vm1449, 1, 0
      %v1452 = vsel %vm1450, 1, 0
      %v1453 = vcvt.s32.f32 %v1451
      %v1454 = vcvt.s32.f32 %v1452
      %v1455 = vstv %s1440
      %v1456 = vmul.f32 %v1455, %v1453
      %v1457 = vmul.f32 %v1455, %v1454
      %v1458 = vadd.f32 %v1390, %v1456
      %v1459 = vadd.f32 %v1391, %v1457
      %v1460 = vadd.f32 %v1392, %v1455
      %v1461 = vrcp.pop %v1460
      %v1462 = vmul.f32 %v1458, %v1461
      %v1463 = vmul.f32 %v1459, %v1461
      %v1464 = vpack.c.bf16 %v1463, %v1462
      %1465 = vrot.lane.b32.xlu0 %v1124, 64
      %v1466 = vpop.permute.xlu0 %1465
      %v1469 = vsel %vm585, %v1464, 0
      %1471 = vmatpush.bf16.msra.mxu0 0
      %1472 = vmatpush.bf16.msra.mxu0 0
      %1473 = vmatpush.bf16.msra.mxu0 0
      %1474 = vmatpush.bf16.msra.mxu0 0
      %1475 = vmatpush.bf16.msra.mxu0 0
      %1476 = vmatpush.bf16.msra.mxu0 0
      %1477 = vmatpush.bf16.msra.mxu0 0
      %1478 = vmatpush.bf16.msra.mxu0 %v1466
      %1479 = vmatmul.bf16.gmra.mxu0 %v1469
      %v1480 = vpop.f32.mrf.mxu0
      %v1481 = vadd.f32 0.0, %v1480
      %v1482 = vpop.f32.mrf.mxu0
      %v1483 = vadd.f32 0.0, %v1482
      %1484 = vdwg.mxu0
      %v1485 = vpack.c.bf16 %v1483, %v1481
      %1486 = vrot.lane.b32.xlu0 %v1103, 32
      %v1487 = vpop.permute.xlu0 %1486
      %1488 = vrot.lane.b32.xlu0 %v1104, 32
      %v1489 = vpop.permute.xlu0 %1488
      %1492 = vrot.lane.b32.xlu0 %v1093, 32
      %v1493 = vpop.permute.xlu0 %1492
      %v1496 = vsel %vm543, %v1485, 0
      %1498 = vmatpush.bf16.msra.mxu0 0
      %1499 = vmatpush.bf16.msra.mxu0 0
      %1500 = vmatpush.bf16.msra.mxu0 0
      %1501 = vmatpush.bf16.msra.mxu0 0
      %1502 = vmatpush.bf16.msra.mxu0 0
      %1503 = vmatpush.bf16.msra.mxu0 0
      %1504 = vmatpush.bf16.msra.mxu0 %v1489
      %1505 = vmatpush.bf16.msra.mxu0 %v1487
      %1506 = vmatmul.bf16.gmra.mxu0 %v1496
      %v1507 = vpop.f32.mrf.mxu0
      %v1508 = vadd.f32 %v1493, %v1507
      %v1509 = vpop.f32.mrf.mxu0
      %v1510 = vadd.f32 %v1493, %v1509
      %1511 = vdwg.mxu0
      %v1512 = vadd.f32 %v1082, %v1508
      %v1513 = vadd.f32 %v1083, %v1510
      %v1514 = vpack.c.bf16 %v1513, %v1512
      %1515 = vmatpush.bf16.msra.mxu0 0
      %1516 = vmatpush.bf16.msra.mxu0 0
      %1517 = vmatpush.bf16.msra.mxu0 0
      %1518 = vmatpush.bf16.msra.mxu0 0
      %1519 = vmatpush.bf16.msra.mxu0 0
      %1520 = vmatpush.bf16.msra.mxu0 0
      %1521 = vmatpush.bf16.msra.mxu0 0
      %1522 = vmatpush.bf16.msra.mxu0 %v1514
      %1523 = vmatmul.bf16.gmra.mxu0 %v960
      %v1524 = vpop.f32.mrf.mxu0
      %v1525 = vadd.f32 0.0, %v1524
      %v1526 = vpop.f32.mrf.mxu0
      %v1527 = vadd.f32 0.0, %v1526
      %1528 = vdwg.mxu0
      %v1529 = vsub.f32 %v1512, %v1525
      %v1530 = vsub.f32 %v1513, %v1527
      %s1531 = scalar_lea.vmem %s7, 16
      %v1532 = vld [vmem:[%s1531] sm:$0xf]
      %v1533 = vld [vmem:[%s1531 + $0x4] sm:$0xf]
      %v1534 = vld [vmem:[%s1531 + $0x8] sm:$0xf]
      %v1535 = vld [vmem:[%s1531 + $0xc] sm:$0xf]
      %v1536 = vpack.c.bf16 %v1530, %v1529
      %v1541 = vunpack.c.l.b16 %v1532
      %v1542 = vunpack.c.l.b16 %v1533
      %v1543 = vunpack.c.l.b16 %v1534
      %v1544 = vunpack.c.l.b16 %v1535
      %v1545 = vpack.c.b16 %v1542, %v1541
      %v1546 = vpack.c.b16 %v1544, %v1543
      %v1550 = vsel %vm543, %v1536, 0
      %1552 = vmatpush.bf16.msra.mxu0 0
      %1553 = vmatpush.bf16.msra.mxu0 0
      %1554 = vmatpush.bf16.msra.mxu0 0
      %1555 = vmatpush.bf16.msra.mxu0 0
      %1556 = vmatpush.bf16.msra.mxu0 0
      %1557 = vmatpush.bf16.msra.mxu0 0
      %1558 = vmatpush.bf16.msra.mxu0 %v1546
      %1559 = vmatpush.bf16.msra.mxu0 %v1545
      %1560 = vmatmul.bf16.gmra.mxu0 %v1550
      %v1561 = vpop.f32.mrf.mxu0
      %v1562 = vadd.f32 0.0, %v1561
      %v1563 = vpop.f32.mrf.mxu0
      %v1564 = vadd.f32 0.0, %v1563
      %1565 = vdwg.mxu0
      %v1566 = vmax.f32 %v1562, 0.0
      %v1567 = vmax.f32 %v1564, 0.0
      %s1568 = scalar_lea.vmem %s8, 32
      %v1569 = vld [vmem:[%s1568] sm:$0xf]
      %v1570 = vld [vmem:[%s1568 + $0x4] sm:$0xf]
      %v1571 = vld [vmem:[%s1568 + $0x8] sm:$0xf]
      %v1572 = vld [vmem:[%s1568 + $0xc] sm:$0xf]
      %v1573 = vld [vmem:[%s1568 + $0x10] sm:$0xf]
      %v1574 = vld [vmem:[%s1568 + $0x14] sm:$0xf]
      %v1575 = vld [vmem:[%s1568 + $0x18] sm:$0xf]
      %v1576 = vld [vmem:[%s1568 + $0x1c] sm:$0xf]
      %v1577 = vpack.c.bf16 %v1567, %v1566
      %v1586 = vunpack.c.l.b16 %v1569
      %v1587 = vunpack.c.l.b16 %v1570
      %v1588 = vunpack.c.l.b16 %v1571
      %v1589 = vunpack.c.l.b16 %v1572
      %v1590 = vunpack.c.l.b16 %v1573
      %v1591 = vunpack.c.l.b16 %v1574
      %v1592 = vunpack.c.l.b16 %v1575
      %v1593 = vunpack.c.l.b16 %v1576
      %v1594 = vpack.c.b16 %v1587, %v1586
      %v1595 = vpack.c.b16 %v1589, %v1588
      %v1596 = vpack.c.b16 %v1591, %v1590
      %v1597 = vpack.c.b16 %v1593, %v1592
      %v1603 = vsel %vm1047, %v1577, 0
      %1605 = vmatpush.bf16.msra.mxu0 0
      %1606 = vmatpush.bf16.msra.mxu0 0
      %1607 = vmatpush.bf16.msra.mxu0 0
      %1608 = vmatpush.bf16.msra.mxu0 0
      %1609 = vmatpush.bf16.msra.mxu0 %v1597
      %1610 = vmatpush.bf16.msra.mxu0 %v1596
      %1611 = vmatpush.bf16.msra.mxu0 %v1595
      %1612 = vmatpush.bf16.msra.mxu0 %v1594
      %1613 = vmatmul.bf16.gmra.mxu0 %v1603
      %v1614 = vpop.f32.mrf.mxu0
      %v1615 = vadd.f32 0.0, %v1614
      %v1616 = vpop.f32.mrf.mxu0
      %v1617 = vadd.f32 0.0, %v1616
      %1618 = vdwg.mxu0
      %v1619 = vadd.f32 %v1529, %v1615
      %v1620 = vadd.f32 %v1530, %v1617
      %v1621 = vpack.c.bf16 %v1620, %v1619
      %1622 = vmatpush.bf16.msra.mxu0 0
      %1623 = vmatpush.bf16.msra.mxu0 0
      %1624 = vmatpush.bf16.msra.mxu0 0
      %1625 = vmatpush.bf16.msra.mxu0 0
      %1626 = vmatpush.bf16.msra.mxu0 0
      %1627 = vmatpush.bf16.msra.mxu0 0
      %1628 = vmatpush.bf16.msra.mxu0 0
      %1629 = vmatpush.bf16.msra.mxu0 %v1621
      %1630 = vmatmul.bf16.gmra.mxu0 %v960
      %v1631 = vpop.f32.mrf.mxu0
      %v1632 = vadd.f32 0.0, %v1631
      %v1633 = vpop.f32.mrf.mxu0
      %v1634 = vadd.f32 0.0, %v1633
      %1635 = vdwg.mxu0
      %v1636 = vsub.f32 %v1619, %v1632
      %v1637 = vsub.f32 %v1620, %v1634
      %v1638 = vsel %vm543, %v1636, 0.0
      %1639 = vadd.xlane.f32.xlu0 %v1638
      %v1640 = vpop.xlane.xlu0 %1639
      %v1641 = vsel %vm543, %v1637, 0.0
      %1642 = vadd.xlane.f32.xlu0 %v1641
      %v1643 = vpop.xlane.xlu0 %1642
      %v1644 = vrcp.pop 32.0
      %v1645 = vmul.f32 32.0, %v1644
      %v1646 = vsub.f32 1.0, %v1645
      %v1647 = vmul.f32 %v1644, %v1646
      %v1648 = vadd.f32 %v1644, %v1647
      %vm1649 = vweird.f32 %v1644
      %v1650 = vsel %vm1649, %v1644, %v1648
      %v1651 = vmul.f32 %v1640, %v1650
      %v1652 = vmul.f32 %v1643, %v1650
      %v1653 = vsub.f32 %v1636, %v1651
      %v1654 = vsub.f32 %v1637, %v1652
      %v1655 = vmul.f32 %v1653, %v1653
      %v1656 = vmul.f32 %v1654, %v1654
      %v1657 = vsel %vm543, %v1655, 0.0
      %1658 = vadd.xlane.f32.xlu0 %v1657
      %v1659 = vpop.xlane.xlu0 %1658
      %v1660 = vsel %vm543, %v1656, 0.0
      %1661 = vadd.xlane.f32.xlu0 %v1660
      %v1662 = vpop.xlane.xlu0 %1661
      %v1663 = vmul.f32 %v1659, %v1650
      %v1664 = vmul.f32 %v1662, %v1650
      %v1665 = vld [vmem:[%s9] sm:$0x1]
      %v1666 = vld [vmem:[%s9 + $0x1] sm:$0x1]
      %v1667 = vadd.f32 %v1663, 1e-05
      %v1668 = vadd.f32 %v1664, 1e-05
      %v1669 = vrsqrt.pop %v1667
      %v1670 = vmul.f32 %v1669, %v1667
      %v1671 = vmul.f32 %v1670, %v1669
      %v1672 = vmul.f32 0.5, %v1671
      %v1673 = vsub.f32 1.5, %v1672
      %v1674 = vmul.f32 %v1669, %v1673
      %vm1675 = vweird.f32 %v1667
      %vm1676 = vweird.f32 %v1669
      %vm1677 = vmor %vm1675, %vm1676
      %v1678 = vsel %vm1677, %v1669, %v1674
      %v1679 = vrsqrt.pop %v1668
      %v1680 = vmul.f32 %v1679, %v1668
      %v1681 = vmul.f32 %v1680, %v1679
      %v1682 = vmul.f32 0.5, %v1681
      %v1683 = vsub.f32 1.5, %v1682
      %v1684 = vmul.f32 %v1679, %v1683
      %vm1685 = vweird.f32 %v1668
      %vm1686 = vweird.f32 %v1679
      %vm1687 = vmor %vm1685, %vm1686
      %v1688 = vsel %vm1687, %v1679, %v1684
      %v1689 = vmul.f32 %v1653, %v1678
      %v1690 = vmul.f32 %v1654, %v1688
      %v1691 = vperm.slane %v1665, 0
      %v1692 = vmul.f32 %v1689, %v1691
      %v1693 = vmul.f32 %v1690, %v1691
      %v1694 = vperm.slane %v1666, 0
      %v1695 = vadd.f32 %v1692, %v1694
      %v1696 = vadd.f32 %v1693, %v1694
      %v1697 = vsel %vm543, %v1695, 0.0
      %v1698 = vsel %vm543, %v1696, 0.0
      %v1699 = vadd.f32 %v1697, %v1698
      %v1700 = vrot.slane %v1699, 4
      %v1701 = vadd.f32 %v1699, %v1700
      %v1702 = vrot.slane %v1701, 2
      %v1703 = vadd.f32 %v1701, %v1702
      %v1704 = vrot.slane %v1703, 1
      %v1705 = vadd.f32 %v1703, %v1704
      %v1706 = vrcp.pop 16.0
      %v1707 = vmul.f32 16.0, %v1706
      %v1708 = vsub.f32 1.0, %v1707
      %v1709 = vmul.f32 %v1706, %v1708
      %v1710 = vadd.f32 %v1706, %v1709
      %vm1711 = vweird.f32 %v1706
      %v1712 = vsel %vm1711, %v1706, %v1710
      %v1713 = vmul.f32 %v1705, %v1712
      %v1714 = vsub.f32 %v1695, %v1713
      %v1715 = vsub.f32 %v1696, %v1713
      %v1716 = vld [vmem:[%s11] sm:$0xf]
      %v1717 = vld [vmem:[%s11 + $0x4] sm:$0xf]
      %v1718 = vld [vmem:[%s11 + $0x8] sm:$0xf]
      %v1719 = vld [vmem:[%s11 + $0xc] sm:$0xf]
      %v1720 = vpack.c.bf16 %v1715, %v1714
      %v1721 = vld [vmem:[%s12] sm:$0x1]
      %v1723 = vperm.slane %v1721, 0
      %v1729 = vunpack.c.l.b16 %v1716
      %v1730 = vunpack.c.l.b16 %v1717
      %v1731 = vunpack.c.l.b16 %v1718
      %v1732 = vunpack.c.l.b16 %v1719
      %v1733 = vpack.c.b16 %v1730, %v1729
      %v1734 = vpack.c.b16 %v1732, %v1731
      %v1738 = vsel %vm543, %v1720, 0
      %1740 = vmatpush.bf16.msra.mxu0 0
      %1741 = vmatpush.bf16.msra.mxu0 0
      %1742 = vmatpush.bf16.msra.mxu0 0
      %1743 = vmatpush.bf16.msra.mxu0 0
      %1744 = vmatpush.bf16.msra.mxu0 0
      %1745 = vmatpush.bf16.msra.mxu0 0
      %1746 = vmatpush.bf16.msra.mxu0 %v1734
      %1747 = vmatpush.bf16.msra.mxu0 %v1733
      %1748 = vmatmul.bf16.gmra.mxu0 %v1738
      %v1749 = vpop.f32.mrf.mxu0
      %v1750 = vadd.f32 %v1723, %v1749
      %v1751 = vpop.f32.mrf.mxu0
      %v1752 = vadd.f32 %v1723, %v1751
      %1753 = vdwg.mxu0
      %v1754 = vld [vmem:[%s475] sm:$0xff]
      %v1755 = vld [vmem:[%s475 + $0x8] sm:$0xff]
      %v1756 = vld [vmem:[%s470] sm:$0xff]
      %v1757 = vld [vmem:[%s470 + $0x8] sm:$0xff]
      %v1758 = vmul.f32 %v1754, %v1756
      %v1759 = vmul.f32 %v1755, %v1757
      %v1760 = vsub.f32 1.0, %v1754
      %v1761 = vsub.f32 1.0, %v1755
      %v1762 = vmul.f32 %v1760, %v1750
      %v1763 = vmul.f32 %v1761, %v1752
      %v1764 = vadd.f32 %v1758, %v1762
      %v1765 = vadd.f32 %v1759, %v1763
      %1766 = vst [vmem:[%s480] sm:$0xff] %v1764
      %1767 = vst [vmem:[%s480 + $0x8] sm:$0xff] %v1765
      %p1768 = scmp.lt.s32.totalorder %s24, 1
      %s1769 = scalar_select %p1768, %s24, 1
      %s1770 = smul.addr %s1769, 2
      %s1771 = smul.addr %s1770, 8
      %s1772 = scalar_lea.vmem %s13, %s1771
      // Predicated region
      $region73: #{autoformer_forward.1} parent=71 // pred_check
        %p1773 = pneg %p330
      $region74: #{autoformer_forward.1} parent=71 // pred_check_branch
        %1775 = sbr.rel (%p1773) target = $region76
      $region75: #{autoformer_forward.1} parent=71 // pred_region
        _
      $region76: #{autoformer_forward.1} parent=71 // pred_fallthru
        _
    $region72: #{autoformer_forward.1} parent=5 // pred_fallthru
      _
    %p1776 = scmp.le.s32.totalorder 2, %s19
    // Predicated region
    $region77: #{autoformer_forward.1} parent=5 // pred_check
      %p1777 = pneg %p1776
    $region78: #{autoformer_forward.1} parent=5 // pred_check_branch
      %1779 = sbr.rel (%p1777) target = $region80
    $region79: #{autoformer_forward.1} parent=5 // pred_region
      %s1780 = ssub.s32 %s19, 2
      // Predicated region
      $region81: #{autoformer_forward.1} parent=79 // pred_check
        %p1781 = pneg %p336
      $region82: #{autoformer_forward.1} parent=79 // pred_check_branch
        %1783 = sbr.rel (%p1781) target = $region84
      $region83: #{autoformer_forward.1} parent=79 // pred_region
        %p1784 = scmp.lt.s32.totalorder %s25, 1
        %s1785 = scalar_select %p1784, %s25, 1
        %s1786 = smul.addr %s1785, 2
        %s1787 = smul.addr %s1786, 8
        %s1788 = scalar_lea.vmem %s13, %s1787
      $region84: #{autoformer_forward.1} parent=79 // pred_fallthru
        _
    $region80: #{autoformer_forward.1} parent=5 // pred_fallthru
      _
  $region6: #{autoformer_forward.1} parent=0 // loop_footer
    %s23 = sadd.s32 1, %s19
  $region7: #{autoformer_forward.1} parent=0 // loop_footer_branch
    %18 = sbr.rel target = $region3
  $region8: #{autoformer_forward.1} parent=0 // loop_exit
    _

</llo_original>
